<compile_context>
chip_gen: v5e
topology: v5e:2x2
jax: 0.10.0
libtpu: 0.0.40
codegen_flags: <defaults>
</compile_context>

<pallas_src>
import functools

import numpy as np
import jax
import jax.numpy as jnp
from jax.experimental import pallas as pl
from jax.experimental.pallas import tpu as pltpu


PAD_OUT = 128   # lane-dense output width for the final (N, 1) sigmoid layer


# ----------------------------------------------------------------------------
# Pallas kernels
# ----------------------------------------------------------------------------
def gin_stack_kernel(adj_ref, x0_ref, *refs, eps_list, n_nodes):
    """All five GIN layers fused; A and activations stay resident in VMEM.

    Per layer:
        agg = A @ x + (1 + eps) * x                (bf16 MXU, f32 accumulate)
        h   = Linear-ReLU-Linear-ReLU-Linear(agg)  (dropout p=0 -> no-op)
        then BatchNorm1d(train stats, gamma=1, beta=0) + ReLU,
        or sigmoid for the last layer.
    """
    out_ref = refs[-1]
    wr = refs[:-1]                       # 5 layers x (w1, b1, w2, b2, w3, b3)

    adj = adj_ref[...]                   # (N, N) bf16, resident for all layers
    inv_n = 1.0 / float(n_nodes)
    n_layers = len(eps_list)

    def layer(x, idx):
        w1, b1, w2, b2, w3, b3 = (wr[6 * idx + k][...] for k in range(6))
        eps = eps_list[idx]
        first = idx == 0
        last = idx == n_layers - 1

        # Neighbourhood aggregation on the MXU (bf16 in, f32 accumulate).
        agg = jnp.dot(adj, x.astype(jnp.bfloat16),
                      preferred_element_type=jnp.float32)
        agg = agg + (1.0 + eps) * x

        if first:
            # F_in == 1: (N,1) @ (1,64) is a broadcast outer product on the
            # VPU; skip the pointless K=1 MXU round trip.
            h = agg * w1[0, :] + b1
        else:
            h = jnp.dot(agg, w1, preferred_element_type=jnp.float32) + b1
        h = jnp.maximum(h, 0.0)
        h = jnp.dot(h, w2, preferred_element_type=jnp.float32) + b2
        h = jnp.maximum(h, 0.0)
        h = jnp.dot(h, w3, preferred_element_type=jnp.float32) + b3

        if last:
            return jax.nn.sigmoid(h)

        # BatchNorm1d (training mode, batch stats, biased var, eps=1e-5,
        # gamma=1/beta=0) + ReLU.  One pass: mean = sum/N, var = sumsq/N - mean^2.
        s = jnp.sum(h, axis=0, keepdims=True)
        ss = jnp.sum(h * h, axis=0, keepdims=True)
        mean = s * inv_n
        var = ss * inv_n - mean * mean
        h = (h - mean) * jax.lax.rsqrt(var + 1e-5)
        return jnp.maximum(h, 0.0)

    x = x0_ref[...]                      # (N, 1) f32 node weights
    for idx in range(n_layers):
        x = layer(x, idx)
    out_ref[...] = x.astype(out_ref.dtype)    # (N, PAD_OUT), col 0 = prob


def loss_thresholds_kernel(w_ref, x_ref, adj_ref, out_ref):
    """Per-graph loss: gamma - w.x + x^T A x, output shape (B, 1)."""
    w = w_ref[...]                       # (B, Nmax)
    x = x_ref[...]                       # (B, Nmax)
    adj = adj_ref[...]                   # (B, Nmax, Nmax)

    gamma = jnp.sum(w, axis=1, keepdims=True)        # (B, 1)
    term1 = -jnp.sum(w * x, axis=1, keepdims=True)   # (B, 1)
    # x^T A x as a batched MXU matvec; keeps only (B, Nmax) live instead of
    # materializing a (B, Nmax, Nmax) elementwise temporary on the VPU.
    t = jnp.einsum('bqj,bij->bqi', x[:, None, :], adj,
                   preferred_element_type=jnp.float32)       # (B, 1, Nmax)
    term2 = jnp.sum(x * t[:, 0, :], axis=1, keepdims=True)   # (B, 1)

    out_ref[...] = gamma + term1 + term2


# ----------------------------------------------------------------------------
# Wrappers
# ----------------------------------------------------------------------------
_VMEM_SPEC = pl.BlockSpec(memory_space=pltpu.MemorySpace.VMEM)


def _vmem_limit_bytes(*arrays, extra=0):
    need = sum(int(a.size) * int(a.dtype.itemsize) for a in arrays) + int(extra)
    # 2x headroom for compiler temps; floor at 32 MiB, cap at 64 MiB
    # (v7x physical VMEM) so the request is valid on all generations.
    return int(min(max(2 * need + (8 << 20), 32 << 20), 64 << 20))


def gin_stack(adj_bf16, x0, flat_params, eps_list):
    """Run all five GIN layers in one pallas_call; returns (N, 1) probs."""
    # TODO(synk): for N beyond VMEM-resident A (~4k nodes bf16 on v7x, ~8k on
    # v5e/v6e) add a row-tiled grid path (BlockSpec((TM, N)) over A, x fully
    # resident, cross-tile BN sum/sumsq accumulation, dimension_semantics).
    n = x0.shape[0]
    kernel = functools.partial(gin_stack_kernel,
                               eps_list=tuple(eps_list), n_nodes=n)
    vmem_limit = _vmem_limit_bytes(adj_bf16, x0, *flat_params,
                                   extra=n * (PAD_OUT + 8 * 64) * 4)
    out = pl.pallas_call(
        kernel,
        out_shape=jax.ShapeDtypeStruct((n, PAD_OUT), jnp.float32),
        in_specs=[_VMEM_SPEC] * (2 + len(flat_params)),
        out_specs=_VMEM_SPEC,
        compiler_params=pltpu.CompilerParams(vmem_limit_bytes=vmem_limit),
    )(adj_bf16, x0, *flat_params)
    return out[:, :1]                    # (N, 1)


def loss_thresholds(w_dense, prob_dense, adj_dense):
    b = adj_dense.shape[0]
    return pl.pallas_call(
        loss_thresholds_kernel,
        out_shape=jax.ShapeDtypeStruct((b, 1), jnp.float32),
        in_specs=[_VMEM_SPEC] * 3,
        out_specs=_VMEM_SPEC,
    )(w_dense, prob_dense[..., 0], adj_dense)


# ----------------------------------------------------------------------------
# Parameter init (deterministic, synthetic) and flattening
# ----------------------------------------------------------------------------
def init_mlp(key, sizes):
    params = {"eps": 0.0}   # GINConv(train_eps=True) initial eps = 0
    ks = jax.random.split(key, 2 * (len(sizes) - 1))
    for i in range(len(sizes) - 1):
        fan_in, fan_out = sizes[i], sizes[i + 1]
        bound = 1.0 / np.sqrt(fan_in)
        w = jax.random.uniform(ks[2 * i], (fan_in, fan_out),
                               jnp.float32, -bound, bound)
        bvec = jax.random.uniform(ks[2 * i + 1], (1, fan_out),
                                  jnp.float32, -bound, bound)
        params[f"w{i + 1}"] = w
        params[f"b{i + 1}"] = bvec
    return params


def init_params(seed=0):
    key = jax.random.PRNGKey(seed)
    k1, k2, k3, k5, k6 = jax.random.split(key, 5)
    return {
        "conv1": init_mlp(k1, [1, 64, 64, 64]),
        "conv2": init_mlp(k2, [64, 64, 64, 64]),
        "conv3": init_mlp(k3, [64, 64, 64, 64]),
        # conv4 / bn4 are defined in __init__ but never used in forward()
        "conv5": init_mlp(k5, [64, 64, 64, 64]),
        "conv6": init_mlp(k6, [64, 64, 64, 1]),
    }


_CONV_ORDER = ("conv1", "conv2", "conv3", "conv5", "conv6")


def flatten_gin_params(params):
    flat, eps_list = [], []
    for li, name in enumerate(_CONV_ORDER):
        p = params[name]
        eps_list.append(float(p["eps"]))
        w3, b3 = p["w3"], p["b3"]
        if li == len(_CONV_ORDER) - 1:
            # Pad the 1-wide output layer to PAD_OUT lanes -> dense stores.
            w3 = jnp.pad(w3, ((0, 0), (0, PAD_OUT - w3.shape[1])))
            b3 = jnp.pad(b3, ((0, 0), (0, PAD_OUT - b3.shape[1])))
        flat += [p["w1"], p["b1"], p["w2"], p["b2"], w3, b3]
    return flat, eps_list


# ----------------------------------------------------------------------------
# Dense-batch glue (numpy, equivalent to torch_geometric to_dense_batch / adj)
# ----------------------------------------------------------------------------
def dense_batch_info(batch_np):
    B = int(batch_np.max()) + 1
    counts = np.bincount(batch_np, minlength=B)
    n_max = int(counts.max())
    pos = np.zeros_like(batch_np)
    for b in range(B):
        pos[batch_np == b] = np.arange(counts[b])
    return B, n_max, pos, counts


def to_dense_batch_np(x_np, batch_np):
    B, n_max, pos, counts = dense_batch_info(batch_np)
    feat = x_np.shape[1:] if x_np.ndim > 1 else ()
    dense = np.zeros((B, n_max) + feat, dtype=x_np.dtype)
    mask = np.zeros((B, n_max), dtype=bool)
    dense[batch_np, pos] = x_np
    mask[batch_np, pos] = True
    return dense, mask


def to_dense_adj_np(edge_index_np, batch_np):
    B, n_max, pos, counts = dense_batch_info(batch_np)
    adj = np.zeros((B, n_max, n_max), dtype=np.float32)
    src, dst = edge_index_np[0], edge_index_np[1]
    for s, d in zip(src, dst):
        adj[batch_np[s], pos[s], pos[d]] += 1.0
    return adj


# ----------------------------------------------------------------------------
# Host-side greedy conditional expectation (sequential, not a Pallas hot path)
# ----------------------------------------------------------------------------
def _loss_fn_np(w, x, adj, gamma):
    xv = np.asarray(x).reshape(-1)
    term1 = -float(np.dot(w, xv))
    term2 = float(xv @ adj @ xv)
    return gamma + term1 + term2


def conditional_expectation(w_dense, prob_dense, adj, loss_threshold, gammas, mask):
    # TODO(synk): data-dependent greedy loop with Python sets — kept on host.
    B, n_max = adj.shape[0], adj.shape[1]
    thr = np.asarray(loss_threshold, dtype=np.float64).reshape(-1)   # (B,)
    order = np.argsort(-prob_dense[:, :, 0], axis=1, kind="stable")
    selected = [set() for _ in range(B)]
    rejected = [set() for _ in range(B)]
    prob_copy = prob_dense.copy()
    out = []
    for b in range(B):
        for i in range(n_max):
            node_index = int(order[b, i])
            neighbors = np.where(adj[b, node_index] == 1)[0]
            if len(neighbors) == 0:
                selected[b].add(node_index)
                continue
            if node_index not in rejected[b] and node_index not in selected[b]:
                temp = prob_copy.copy()
                temp[b, node_index] = 1.0
                temp[b, neighbors] = 0.0
                loss = _loss_fn_np(w_dense[b], temp[b], adj[b], float(gammas[b]))
                if loss <= thr[b]:
                    selected[b].add(node_index)
                    for n in neighbors.tolist():
                        rejected[b].add(n)
                    prob_copy[b, node_index] = 1.0
                    prob_copy[b, neighbors] = 0.0
        mwis = np.array(sorted(selected[b]), dtype=np.int64)
        n_valid = int(mask[b].sum())
        out.append(list(mwis[mwis < n_valid]) if mwis.size else [])
    return out


# ----------------------------------------------------------------------------
# Full forward pass
# ----------------------------------------------------------------------------
def mis_solver_forward(params, w, edge_index, batch):
    w = jnp.asarray(w, jnp.float32)
    n = w.shape[0]
    edge_index_np = np.asarray(edge_index)
    batch_np = np.asarray(batch)

    # Dense aggregation matrix A[dst, src] += 1 (PyG source->target message
    # flow).  Edge counts are small integers so bf16 is exact and halves the
    # dominant N^2 HBM traffic / VMEM footprint of the fused kernel.
    src = jnp.asarray(edge_index_np[0])
    dst = jnp.asarray(edge_index_np[1])
    A = jnp.zeros((n, n), jnp.float32).at[dst, src].add(1.0)
    A = A.astype(jnp.bfloat16)

    flat_params, eps_list = flatten_gin_params(params)
    # relu(bn1..3,5(conv1..3,5)) + sigmoid(conv6), all in one fused kernel.
    prob = gin_stack(A, w[:, None], flat_params, eps_list)            # (N, 1)

    prob_np = np.asarray(prob)
    w_np = np.asarray(w)
    prob_dense, prob_mask = to_dense_batch_np(prob_np, batch_np)      # (B, Nmax, 1)
    w_dense, _ = to_dense_batch_np(w_np, batch_np)                    # (B, Nmax)
    adj_dense = to_dense_adj_np(edge_index_np, batch_np)              # (B, Nmax, Nmax)
    gammas = w_dense.sum(axis=1)                                      # (B,)

    thr = loss_thresholds(jnp.asarray(w_dense),
                          jnp.asarray(prob_dense),
                          jnp.asarray(adj_dense))                     # (B, 1) via Pallas
    loss = jnp.sum(thr) / adj_dense.shape[0]

    mis = conditional_expectation(w_dense, prob_dense, adj_dense,
                                  np.asarray(thr), gammas, prob_mask)
    return loss, mis


# ----------------------------------------------------------------------------
if __name__ == "__main__":
    # two graphs with 8 nodes each, each a ring (undirected -> both directions)
    nodes_per_graph = 8
    num_graphs = 2
    n_total = nodes_per_graph * num_graphs

    src_list, dst_list = [], []
    for g in range(num_graphs):
        off = g * nodes_per_graph
        for i in range(nodes_per_graph):
            a, b = off + i, off + (i + 1) % nodes_per_graph
            src_list += [a, b]
            dst_list += [b, a]
    edge_index = np.stack([np.array(src_list, np.int32),
                           np.array(dst_list, np.int32)])             # (2, 32)
    batch = np.repeat(np.arange(num_graphs, dtype=np.int32), nodes_per_graph)

    key = jax.random.PRNGKey(0)
    w = jax.random.uniform(key, (n_total,), jnp.float32, 0.1, 1.0)    # node weights

    params = init_params(seed=0)

    loss, mis = mis_solver_forward(params, w, edge_index, batch)
    loss = jax.block_until_ready(loss)

    assert np.isfinite(float(loss))
    assert isinstance(mis, list) and len(mis) == num_graphs
    print("KERNEL_OK")
</pallas_src>

<mosaic_0001>
module attributes {stable_mosaic.version = 11 : i64} {
  func.func @gin_stack_kernel(%arg0: memref<16x16xbf16, #tpu.memory_space<vmem>>, %arg1: memref<16x1xf32, #tpu.memory_space<vmem>>, %arg2: memref<1x64xf32, #tpu.memory_space<vmem>>, %arg3: memref<1x64xf32, #tpu.memory_space<vmem>>, %arg4: memref<64x64xf32, #tpu.memory_space<vmem>>, %arg5: memref<1x64xf32, #tpu.memory_space<vmem>>, %arg6: memref<64x64xf32, #tpu.memory_space<vmem>>, %arg7: memref<1x64xf32, #tpu.memory_space<vmem>>, %arg8: memref<64x64xf32, #tpu.memory_space<vmem>>, %arg9: memref<1x64xf32, #tpu.memory_space<vmem>>, %arg10: memref<64x64xf32, #tpu.memory_space<vmem>>, %arg11: memref<1x64xf32, #tpu.memory_space<vmem>>, %arg12: memref<64x64xf32, #tpu.memory_space<vmem>>, %arg13: memref<1x64xf32, #tpu.memory_space<vmem>>, %arg14: memref<64x64xf32, #tpu.memory_space<vmem>>, %arg15: memref<1x64xf32, #tpu.memory_space<vmem>>, %arg16: memref<64x64xf32, #tpu.memory_space<vmem>>, %arg17: memref<1x64xf32, #tpu.memory_space<vmem>>, %arg18: memref<64x64xf32, #tpu.memory_space<vmem>>, %arg19: memref<1x64xf32, #tpu.memory_space<vmem>>, %arg20: memref<64x64xf32, #tpu.memory_space<vmem>>, %arg21: memref<1x64xf32, #tpu.memory_space<vmem>>, %arg22: memref<64x64xf32, #tpu.memory_space<vmem>>, %arg23: memref<1x64xf32, #tpu.memory_space<vmem>>, %arg24: memref<64x64xf32, #tpu.memory_space<vmem>>, %arg25: memref<1x64xf32, #tpu.memory_space<vmem>>, %arg26: memref<64x64xf32, #tpu.memory_space<vmem>>, %arg27: memref<1x64xf32, #tpu.memory_space<vmem>>, %arg28: memref<64x64xf32, #tpu.memory_space<vmem>>, %arg29: memref<1x64xf32, #tpu.memory_space<vmem>>, %arg30: memref<64x128xf32, #tpu.memory_space<vmem>>, %arg31: memref<1x128xf32, #tpu.memory_space<vmem>>, %arg32: memref<16x128xf32, #tpu.memory_space<vmem>>) attributes {dimension_semantics = [], scalar_prefetch = 0 : i64, scratch_operands = 0 : i64, tpu.core_type = #tpu.core_type<tc>} {
    %c0 = arith.constant 0 : index
    %c0_0 = arith.constant 0 : index
    %0 = vector.load %arg0[%c0, %c0_0] : memref<16x16xbf16, #tpu.memory_space<vmem>>, vector<16x16xbf16>
    %c0_1 = arith.constant 0 : index
    %c0_2 = arith.constant 0 : index
    %1 = vector.load %arg1[%c0_1, %c0_2] : memref<16x1xf32, #tpu.memory_space<vmem>>, vector<16x1xf32>
    %c0_3 = arith.constant 0 : index
    %c0_4 = arith.constant 0 : index
    %2 = vector.load %arg2[%c0_3, %c0_4] : memref<1x64xf32, #tpu.memory_space<vmem>>, vector<1x64xf32>
    %c0_5 = arith.constant 0 : index
    %c0_6 = arith.constant 0 : index
    %3 = vector.load %arg3[%c0_5, %c0_6] : memref<1x64xf32, #tpu.memory_space<vmem>>, vector<1x64xf32>
    %c0_7 = arith.constant 0 : index
    %c0_8 = arith.constant 0 : index
    %4 = vector.load %arg4[%c0_7, %c0_8] : memref<64x64xf32, #tpu.memory_space<vmem>>, vector<64x64xf32>
    %c0_9 = arith.constant 0 : index
    %c0_10 = arith.constant 0 : index
    %5 = vector.load %arg5[%c0_9, %c0_10] : memref<1x64xf32, #tpu.memory_space<vmem>>, vector<1x64xf32>
    %c0_11 = arith.constant 0 : index
    %c0_12 = arith.constant 0 : index
    %6 = vector.load %arg6[%c0_11, %c0_12] : memref<64x64xf32, #tpu.memory_space<vmem>>, vector<64x64xf32>
    %c0_13 = arith.constant 0 : index
    %c0_14 = arith.constant 0 : index
    %7 = vector.load %arg7[%c0_13, %c0_14] : memref<1x64xf32, #tpu.memory_space<vmem>>, vector<1x64xf32>
    %8 = arith.truncf %1 : vector<16x1xf32> to vector<16x1xbf16>
    %cst = arith.constant dense<0.000000e+00> : vector<16x1xf32>
    %9 = tpu.matmul %0, %8, %cst {dimension_numbers = #tpu.dot_dimension_numbers<[1], [0], [0], [1], [0, 0, 1, 1], [], []>} : vector<16x16xbf16>, vector<16x1xbf16>, vector<16x1xf32> -> vector<16x1xf32>
    %cst_15 = arith.constant 1.000000e+00 : f32
    %10 = vector.broadcast %cst_15 : f32 to vector<16x1xf32>
    %11 = arith.mulf %10, %1 : vector<16x1xf32>
    %12 = arith.addf %9, %11 : vector<16x1xf32>
    %13 = vector.shape_cast %2 : vector<1x64xf32> to vector<64xf32>
    %14 = vector.shape_cast %13 : vector<64xf32> to vector<1x64xf32>
    %15 = vector.broadcast %12 : vector<16x1xf32> to vector<16x64xf32>
    %16 = vector.broadcast %14 : vector<1x64xf32> to vector<16x64xf32>
    %17 = arith.mulf %15, %16 : vector<16x64xf32>
    %18 = vector.broadcast %3 : vector<1x64xf32> to vector<16x64xf32>
    %19 = arith.addf %17, %18 : vector<16x64xf32>
    %cst_16 = arith.constant 0.000000e+00 : f32
    %20 = vector.broadcast %cst_16 : f32 to vector<16x64xf32>
    %21 = arith.maximumf %19, %20 : vector<16x64xf32>
    %cst_17 = arith.constant dense<0.000000e+00> : vector<16x64xf32>
    %22 = tpu.matmul %21, %4, %cst_17 {dimension_numbers = #tpu.dot_dimension_numbers<[1], [0], [0], [1], [0, 0, 1, 1], [], []>} : vector<16x64xf32>, vector<64x64xf32>, vector<16x64xf32> -> vector<16x64xf32>
    %23 = vector.broadcast %5 : vector<1x64xf32> to vector<16x64xf32>
    %24 = arith.addf %22, %23 : vector<16x64xf32>
    %cst_18 = arith.constant 0.000000e+00 : f32
    %25 = vector.broadcast %cst_18 : f32 to vector<16x64xf32>
    %26 = arith.maximumf %24, %25 : vector<16x64xf32>
    %cst_19 = arith.constant dense<0.000000e+00> : vector<16x64xf32>
    %27 = tpu.matmul %26, %6, %cst_19 {dimension_numbers = #tpu.dot_dimension_numbers<[1], [0], [0], [1], [0, 0, 1, 1], [], []>} : vector<16x64xf32>, vector<64x64xf32>, vector<16x64xf32> -> vector<16x64xf32>
    %28 = vector.broadcast %7 : vector<1x64xf32> to vector<16x64xf32>
    %29 = arith.addf %27, %28 : vector<16x64xf32>
    %cst_20 = arith.constant dense<0.000000e+00> : vector<64xf32>
    %30 = vector.multi_reduction <add>, %29, %cst_20 [0] : vector<16x64xf32> to vector<64xf32>
    %31 = vector.shape_cast %30 : vector<64xf32> to vector<1x64xf32>
    %32 = arith.mulf %29, %29 : vector<16x64xf32>
    %cst_21 = arith.constant dense<0.000000e+00> : vector<64xf32>
    %33 = vector.multi_reduction <add>, %32, %cst_21 [0] : vector<16x64xf32> to vector<64xf32>
    %34 = vector.shape_cast %33 : vector<64xf32> to vector<1x64xf32>
    %cst_22 = arith.constant 6.250000e-02 : f32
    %35 = vector.broadcast %cst_22 : f32 to vector<1x64xf32>
    %36 = arith.mulf %31, %35 : vector<1x64xf32>
    %cst_23 = arith.constant 6.250000e-02 : f32
    %37 = vector.broadcast %cst_23 : f32 to vector<1x64xf32>
    %38 = arith.mulf %34, %37 : vector<1x64xf32>
    %39 = arith.mulf %36, %36 : vector<1x64xf32>
    %40 = arith.subf %38, %39 : vector<1x64xf32>
    %41 = vector.broadcast %36 : vector<1x64xf32> to vector<16x64xf32>
    %42 = arith.subf %29, %41 : vector<16x64xf32>
    %cst_24 = arith.constant 9.99999974E-6 : f32
    %43 = vector.broadcast %cst_24 : f32 to vector<1x64xf32>
    %44 = arith.addf %40, %43 : vector<1x64xf32>
    %45 = math.rsqrt %44 : vector<1x64xf32>
    %46 = vector.broadcast %45 : vector<1x64xf32> to vector<16x64xf32>
    %47 = arith.mulf %42, %46 : vector<16x64xf32>
    %cst_25 = arith.constant 0.000000e+00 : f32
    %48 = vector.broadcast %cst_25 : f32 to vector<16x64xf32>
    %49 = arith.maximumf %47, %48 : vector<16x64xf32>
    %c0_26 = arith.constant 0 : index
    %c0_27 = arith.constant 0 : index
    %50 = vector.load %arg8[%c0_26, %c0_27] : memref<64x64xf32, #tpu.memory_space<vmem>>, vector<64x64xf32>
    %c0_28 = arith.constant 0 : index
    %c0_29 = arith.constant 0 : index
    %51 = vector.load %arg9[%c0_28, %c0_29] : memref<1x64xf32, #tpu.memory_space<vmem>>, vector<1x64xf32>
    %c0_30 = arith.constant 0 : index
    %c0_31 = arith.constant 0 : index
    %52 = vector.load %arg10[%c0_30, %c0_31] : memref<64x64xf32, #tpu.memory_space<vmem>>, vector<64x64xf32>
    %c0_32 = arith.constant 0 : index
    %c0_33 = arith.constant 0 : index
    %53 = vector.load %arg11[%c0_32, %c0_33] : memref<1x64xf32, #tpu.memory_space<vmem>>, vector<1x64xf32>
    %c0_34 = arith.constant 0 : index
    %c0_35 = arith.constant 0 : index
    %54 = vector.load %arg12[%c0_34, %c0_35] : memref<64x64xf32, #tpu.memory_space<vmem>>, vector<64x64xf32>
    %c0_36 = arith.constant 0 : index
    %c0_37 = arith.constant 0 : index
    %55 = vector.load %arg13[%c0_36, %c0_37] : memref<1x64xf32, #tpu.memory_space<vmem>>, vector<1x64xf32>
    %56 = arith.truncf %49 : vector<16x64xf32> to vector<16x64xbf16>
    %cst_38 = arith.constant dense<0.000000e+00> : vector<16x64xf32>
    %57 = tpu.matmul %0, %56, %cst_38 {dimension_numbers = #tpu.dot_dimension_numbers<[1], [0], [0], [1], [0, 0, 1, 1], [], []>} : vector<16x16xbf16>, vector<16x64xbf16>, vector<16x64xf32> -> vector<16x64xf32>
    %cst_39 = arith.constant 1.000000e+00 : f32
    %58 = vector.broadcast %cst_39 : f32 to vector<16x64xf32>
    %59 = arith.mulf %58, %49 : vector<16x64xf32>
    %60 = arith.addf %57, %59 : vector<16x64xf32>
    %cst_40 = arith.constant dense<0.000000e+00> : vector<16x64xf32>
    %61 = tpu.matmul %60, %50, %cst_40 {dimension_numbers = #tpu.dot_dimension_numbers<[1], [0], [0], [1], [0, 0, 1, 1], [], []>} : vector<16x64xf32>, vector<64x64xf32>, vector<16x64xf32> -> vector<16x64xf32>
    %62 = vector.broadcast %51 : vector<1x64xf32> to vector<16x64xf32>
    %63 = arith.addf %61, %62 : vector<16x64xf32>
    %cst_41 = arith.constant 0.000000e+00 : f32
    %64 = vector.broadcast %cst_41 : f32 to vector<16x64xf32>
    %65 = arith.maximumf %63, %64 : vector<16x64xf32>
    %cst_42 = arith.constant dense<0.000000e+00> : vector<16x64xf32>
    %66 = tpu.matmul %65, %52, %cst_42 {dimension_numbers = #tpu.dot_dimension_numbers<[1], [0], [0], [1], [0, 0, 1, 1], [], []>} : vector<16x64xf32>, vector<64x64xf32>, vector<16x64xf32> -> vector<16x64xf32>
    %67 = vector.broadcast %53 : vector<1x64xf32> to vector<16x64xf32>
    %68 = arith.addf %66, %67 : vector<16x64xf32>
    %cst_43 = arith.constant 0.000000e+00 : f32
    %69 = vector.broadcast %cst_43 : f32 to vector<16x64xf32>
    %70 = arith.maximumf %68, %69 : vector<16x64xf32>
    %cst_44 = arith.constant dense<0.000000e+00> : vector<16x64xf32>
    %71 = tpu.matmul %70, %54, %cst_44 {dimension_numbers = #tpu.dot_dimension_numbers<[1], [0], [0], [1], [0, 0, 1, 1], [], []>} : vector<16x64xf32>, vector<64x64xf32>, vector<16x64xf32> -> vector<16x64xf32>
    %72 = vector.broadcast %55 : vector<1x64xf32> to vector<16x64xf32>
    %73 = arith.addf %71, %72 : vector<16x64xf32>
    %cst_45 = arith.constant dense<0.000000e+00> : vector<64xf32>
    %74 = vector.multi_reduction <add>, %73, %cst_45 [0] : vector<16x64xf32> to vector<64xf32>
    %75 = vector.shape_cast %74 : vector<64xf32> to vector<1x64xf32>
    %76 = arith.mulf %73, %73 : vector<16x64xf32>
    %cst_46 = arith.constant dense<0.000000e+00> : vector<64xf32>
    %77 = vector.multi_reduction <add>, %76, %cst_46 [0] : vector<16x64xf32> to vector<64xf32>
    %78 = vector.shape_cast %77 : vector<64xf32> to vector<1x64xf32>
    %cst_47 = arith.constant 6.250000e-02 : f32
    %79 = vector.broadcast %cst_47 : f32 to vector<1x64xf32>
    %80 = arith.mulf %75, %79 : vector<1x64xf32>
    %cst_48 = arith.constant 6.250000e-02 : f32
    %81 = vector.broadcast %cst_48 : f32 to vector<1x64xf32>
    %82 = arith.mulf %78, %81 : vector<1x64xf32>
    %83 = arith.mulf %80, %80 : vector<1x64xf32>
    %84 = arith.subf %82, %83 : vector<1x64xf32>
    %85 = vector.broadcast %80 : vector<1x64xf32> to vector<16x64xf32>
    %86 = arith.subf %73, %85 : vector<16x64xf32>
    %cst_49 = arith.constant 9.99999974E-6 : f32
    %87 = vector.broadcast %cst_49 : f32 to vector<1x64xf32>
    %88 = arith.addf %84, %87 : vector<1x64xf32>
    %89 = math.rsqrt %88 : vector<1x64xf32>
    %90 = vector.broadcast %89 : vector<1x64xf32> to vector<16x64xf32>
    %91 = arith.mulf %86, %90 : vector<16x64xf32>
    %cst_50 = arith.constant 0.000000e+00 : f32
    %92 = vector.broadcast %cst_50 : f32 to vector<16x64xf32>
    %93 = arith.maximumf %91, %92 : vector<16x64xf32>
    %c0_51 = arith.constant 0 : index
    %c0_52 = arith.constant 0 : index
    %94 = vector.load %arg14[%c0_51, %c0_52] : memref<64x64xf32, #tpu.memory_space<vmem>>, vector<64x64xf32>
    %c0_53 = arith.constant 0 : index
    %c0_54 = arith.constant 0 : index
    %95 = vector.load %arg15[%c0_53, %c0_54] : memref<1x64xf32, #tpu.memory_space<vmem>>, vector<1x64xf32>
    %c0_55 = arith.constant 0 : index
    %c0_56 = arith.constant 0 : index
    %96 = vector.load %arg16[%c0_55, %c0_56] : memref<64x64xf32, #tpu.memory_space<vmem>>, vector<64x64xf32>
    %c0_57 = arith.constant 0 : index
    %c0_58 = arith.constant 0 : index
    %97 = vector.load %arg17[%c0_57, %c0_58] : memref<1x64xf32, #tpu.memory_space<vmem>>, vector<1x64xf32>
    %c0_59 = arith.constant 0 : index
    %c0_60 = arith.constant 0 : index
    %98 = vector.load %arg18[%c0_59, %c0_60] : memref<64x64xf32, #tpu.memory_space<vmem>>, vector<64x64xf32>
    %c0_61 = arith.constant 0 : index
    %c0_62 = arith.constant 0 : index
    %99 = vector.load %arg19[%c0_61, %c0_62] : memref<1x64xf32, #tpu.memory_space<vmem>>, vector<1x64xf32>
    %100 = arith.truncf %93 : vector<16x64xf32> to vector<16x64xbf16>
    %cst_63 = arith.constant dense<0.000000e+00> : vector<16x64xf32>
    %101 = tpu.matmul %0, %100, %cst_63 {dimension_numbers = #tpu.dot_dimension_numbers<[1], [0], [0], [1], [0, 0, 1, 1], [], []>} : vector<16x16xbf16>, vector<16x64xbf16>, vector<16x64xf32> -> vector<16x64xf32>
    %cst_64 = arith.constant 1.000000e+00 : f32
    %102 = vector.broadcast %cst_64 : f32 to vector<16x64xf32>
    %103 = arith.mulf %102, %93 : vector<16x64xf32>
    %104 = arith.addf %101, %103 : vector<16x64xf32>
    %cst_65 = arith.constant dense<0.000000e+00> : vector<16x64xf32>
    %105 = tpu.matmul %104, %94, %cst_65 {dimension_numbers = #tpu.dot_dimension_numbers<[1], [0], [0], [1], [0, 0, 1, 1], [], []>} : vector<16x64xf32>, vector<64x64xf32>, vector<16x64xf32> -> vector<16x64xf32>
    %106 = vector.broadcast %95 : vector<1x64xf32> to vector<16x64xf32>
    %107 = arith.addf %105, %106 : vector<16x64xf32>
    %cst_66 = arith.constant 0.000000e+00 : f32
    %108 = vector.broadcast %cst_66 : f32 to vector<16x64xf32>
    %109 = arith.maximumf %107, %108 : vector<16x64xf32>
    %cst_67 = arith.constant dense<0.000000e+00> : vector<16x64xf32>
    %110 = tpu.matmul %109, %96, %cst_67 {dimension_numbers = #tpu.dot_dimension_numbers<[1], [0], [0], [1], [0, 0, 1, 1], [], []>} : vector<16x64xf32>, vector<64x64xf32>, vector<16x64xf32> -> vector<16x64xf32>
    %111 = vector.broadcast %97 : vector<1x64xf32> to vector<16x64xf32>
    %112 = arith.addf %110, %111 : vector<16x64xf32>
    %cst_68 = arith.constant 0.000000e+00 : f32
    %113 = vector.broadcast %cst_68 : f32 to vector<16x64xf32>
    %114 = arith.maximumf %112, %113 : vector<16x64xf32>
    %cst_69 = arith.constant dense<0.000000e+00> : vector<16x64xf32>
    %115 = tpu.matmul %114, %98, %cst_69 {dimension_numbers = #tpu.dot_dimension_numbers<[1], [0], [0], [1], [0, 0, 1, 1], [], []>} : vector<16x64xf32>, vector<64x64xf32>, vector<16x64xf32> -> vector<16x64xf32>
    %116 = vector.broadcast %99 : vector<1x64xf32> to vector<16x64xf32>
    %117 = arith.addf %115, %116 : vector<16x64xf32>
    %cst_70 = arith.constant dense<0.000000e+00> : vector<64xf32>
    %118 = vector.multi_reduction <add>, %117, %cst_70 [0] : vector<16x64xf32> to vector<64xf32>
    %119 = vector.shape_cast %118 : vector<64xf32> to vector<1x64xf32>
    %120 = arith.mulf %117, %117 : vector<16x64xf32>
    %cst_71 = arith.constant dense<0.000000e+00> : vector<64xf32>
    %121 = vector.multi_reduction <add>, %120, %cst_71 [0] : vector<16x64xf32> to vector<64xf32>
    %122 = vector.shape_cast %121 : vector<64xf32> to vector<1x64xf32>
    %cst_72 = arith.constant 6.250000e-02 : f32
    %123 = vector.broadcast %cst_72 : f32 to vector<1x64xf32>
    %124 = arith.mulf %119, %123 : vector<1x64xf32>
    %cst_73 = arith.constant 6.250000e-02 : f32
    %125 = vector.broadcast %cst_73 : f32 to vector<1x64xf32>
    %126 = arith.mulf %122, %125 : vector<1x64xf32>
    %127 = arith.mulf %124, %124 : vector<1x64xf32>
    %128 = arith.subf %126, %127 : vector<1x64xf32>
    %129 = vector.broadcast %124 : vector<1x64xf32> to vector<16x64xf32>
    %130 = arith.subf %117, %129 : vector<16x64xf32>
    %cst_74 = arith.constant 9.99999974E-6 : f32
    %131 = vector.broadcast %cst_74 : f32 to vector<1x64xf32>
    %132 = arith.addf %128, %131 : vector<1x64xf32>
    %133 = math.rsqrt %132 : vector<1x64xf32>
    %134 = vector.broadcast %133 : vector<1x64xf32> to vector<16x64xf32>
    %135 = arith.mulf %130, %134 : vector<16x64xf32>
    %cst_75 = arith.constant 0.000000e+00 : f32
    %136 = vector.broadcast %cst_75 : f32 to vector<16x64xf32>
    %137 = arith.maximumf %135, %136 : vector<16x64xf32>
    %c0_76 = arith.constant 0 : index
    %c0_77 = arith.constant 0 : index
    %138 = vector.load %arg20[%c0_76, %c0_77] : memref<64x64xf32, #tpu.memory_space<vmem>>, vector<64x64xf32>
    %c0_78 = arith.constant 0 : index
    %c0_79 = arith.constant 0 : index
    %139 = vector.load %arg21[%c0_78, %c0_79] : memref<1x64xf32, #tpu.memory_space<vmem>>, vector<1x64xf32>
    %c0_80 = arith.constant 0 : index
    %c0_81 = arith.constant 0 : index
    %140 = vector.load %arg22[%c0_80, %c0_81] : memref<64x64xf32, #tpu.memory_space<vmem>>, vector<64x64xf32>
    %c0_82 = arith.constant 0 : index
    %c0_83 = arith.constant 0 : index
    %141 = vector.load %arg23[%c0_82, %c0_83] : memref<1x64xf32, #tpu.memory_space<vmem>>, vector<1x64xf32>
    %c0_84 = arith.constant 0 : index
    %c0_85 = arith.constant 0 : index
    %142 = vector.load %arg24[%c0_84, %c0_85] : memref<64x64xf32, #tpu.memory_space<vmem>>, vector<64x64xf32>
    %c0_86 = arith.constant 0 : index
    %c0_87 = arith.constant 0 : index
    %143 = vector.load %arg25[%c0_86, %c0_87] : memref<1x64xf32, #tpu.memory_space<vmem>>, vector<1x64xf32>
    %144 = arith.truncf %137 : vector<16x64xf32> to vector<16x64xbf16>
    %cst_88 = arith.constant dense<0.000000e+00> : vector<16x64xf32>
    %145 = tpu.matmul %0, %144, %cst_88 {dimension_numbers = #tpu.dot_dimension_numbers<[1], [0], [0], [1], [0, 0, 1, 1], [], []>} : vector<16x16xbf16>, vector<16x64xbf16>, vector<16x64xf32> -> vector<16x64xf32>
    %cst_89 = arith.constant 1.000000e+00 : f32
    %146 = vector.broadcast %cst_89 : f32 to vector<16x64xf32>
    %147 = arith.mulf %146, %137 : vector<16x64xf32>
    %148 = arith.addf %145, %147 : vector<16x64xf32>
    %cst_90 = arith.constant dense<0.000000e+00> : vector<16x64xf32>
    %149 = tpu.matmul %148, %138, %cst_90 {dimension_numbers = #tpu.dot_dimension_numbers<[1], [0], [0], [1], [0, 0, 1, 1], [], []>} : vector<16x64xf32>, vector<64x64xf32>, vector<16x64xf32> -> vector<16x64xf32>
    %150 = vector.broadcast %139 : vector<1x64xf32> to vector<16x64xf32>
    %151 = arith.addf %149, %150 : vector<16x64xf32>
    %cst_91 = arith.constant 0.000000e+00 : f32
    %152 = vector.broadcast %cst_91 : f32 to vector<16x64xf32>
    %153 = arith.maximumf %151, %152 : vector<16x64xf32>
    %cst_92 = arith.constant dense<0.000000e+00> : vector<16x64xf32>
    %154 = tpu.matmul %153, %140, %cst_92 {dimension_numbers = #tpu.dot_dimension_numbers<[1], [0], [0], [1], [0, 0, 1, 1], [], []>} : vector<16x64xf32>, vector<64x64xf32>, vector<16x64xf32> -> vector<16x64xf32>
    %155 = vector.broadcast %141 : vector<1x64xf32> to vector<16x64xf32>
    %156 = arith.addf %154, %155 : vector<16x64xf32>
    %cst_93 = arith.constant 0.000000e+00 : f32
    %157 = vector.broadcast %cst_93 : f32 to vector<16x64xf32>
    %158 = arith.maximumf %156, %157 : vector<16x64xf32>
    %cst_94 = arith.constant dense<0.000000e+00> : vector<16x64xf32>
    %159 = tpu.matmul %158, %142, %cst_94 {dimension_numbers = #tpu.dot_dimension_numbers<[1], [0], [0], [1], [0, 0, 1, 1], [], []>} : vector<16x64xf32>, vector<64x64xf32>, vector<16x64xf32> -> vector<16x64xf32>
    %160 = vector.broadcast %143 : vector<1x64xf32> to vector<16x64xf32>
    %161 = arith.addf %159, %160 : vector<16x64xf32>
    %cst_95 = arith.constant dense<0.000000e+00> : vector<64xf32>
    %162 = vector.multi_reduction <add>, %161, %cst_95 [0] : vector<16x64xf32> to vector<64xf32>
    %163 = vector.shape_cast %162 : vector<64xf32> to vector<1x64xf32>
    %164 = arith.mulf %161, %161 : vector<16x64xf32>
    %cst_96 = arith.constant dense<0.000000e+00> : vector<64xf32>
    %165 = vector.multi_reduction <add>, %164, %cst_96 [0] : vector<16x64xf32> to vector<64xf32>
    %166 = vector.shape_cast %165 : vector<64xf32> to vector<1x64xf32>
    %cst_97 = arith.constant 6.250000e-02 : f32
    %167 = vector.broadcast %cst_97 : f32 to vector<1x64xf32>
    %168 = arith.mulf %163, %167 : vector<1x64xf32>
    %cst_98 = arith.constant 6.250000e-02 : f32
    %169 = vector.broadcast %cst_98 : f32 to vector<1x64xf32>
    %170 = arith.mulf %166, %169 : vector<1x64xf32>
    %171 = arith.mulf %168, %168 : vector<1x64xf32>
    %172 = arith.subf %170, %171 : vector<1x64xf32>
    %173 = vector.broadcast %168 : vector<1x64xf32> to vector<16x64xf32>
    %174 = arith.subf %161, %173 : vector<16x64xf32>
    %cst_99 = arith.constant 9.99999974E-6 : f32
    %175 = vector.broadcast %cst_99 : f32 to vector<1x64xf32>
    %176 = arith.addf %172, %175 : vector<1x64xf32>
    %177 = math.rsqrt %176 : vector<1x64xf32>
    %178 = vector.broadcast %177 : vector<1x64xf32> to vector<16x64xf32>
    %179 = arith.mulf %174, %178 : vector<16x64xf32>
    %cst_100 = arith.constant 0.000000e+00 : f32
    %180 = vector.broadcast %cst_100 : f32 to vector<16x64xf32>
    %181 = arith.maximumf %179, %180 : vector<16x64xf32>
    %c0_101 = arith.constant 0 : index
    %c0_102 = arith.constant 0 : index
    %182 = vector.load %arg26[%c0_101, %c0_102] : memref<64x64xf32, #tpu.memory_space<vmem>>, vector<64x64xf32>
    %c0_103 = arith.constant 0 : index
    %c0_104 = arith.constant 0 : index
    %183 = vector.load %arg27[%c0_103, %c0_104] : memref<1x64xf32, #tpu.memory_space<vmem>>, vector<1x64xf32>
    %c0_105 = arith.constant 0 : index
    %c0_106 = arith.constant 0 : index
    %184 = vector.load %arg28[%c0_105, %c0_106] : memref<64x64xf32, #tpu.memory_space<vmem>>, vector<64x64xf32>
    %c0_107 = arith.constant 0 : index
    %c0_108 = arith.constant 0 : index
    %185 = vector.load %arg29[%c0_107, %c0_108] : memref<1x64xf32, #tpu.memory_space<vmem>>, vector<1x64xf32>
    %c0_109 = arith.constant 0 : index
    %c0_110 = arith.constant 0 : index
    %186 = vector.load %arg30[%c0_109, %c0_110] : memref<64x128xf32, #tpu.memory_space<vmem>>, vector<64x128xf32>
    %c0_111 = arith.constant 0 : index
    %c0_112 = arith.constant 0 : index
    %187 = vector.load %arg31[%c0_111, %c0_112] : memref<1x128xf32, #tpu.memory_space<vmem>>, vector<1x128xf32>
    %188 = arith.truncf %181 : vector<16x64xf32> to vector<16x64xbf16>
    %cst_113 = arith.constant dense<0.000000e+00> : vector<16x64xf32>
    %189 = tpu.matmul %0, %188, %cst_113 {dimension_numbers = #tpu.dot_dimension_numbers<[1], [0], [0], [1], [0, 0, 1, 1], [], []>} : vector<16x16xbf16>, vector<16x64xbf16>, vector<16x64xf32> -> vector<16x64xf32>
    %cst_114 = arith.constant 1.000000e+00 : f32
    %190 = vector.broadcast %cst_114 : f32 to vector<16x64xf32>
    %191 = arith.mulf %190, %181 : vector<16x64xf32>
    %192 = arith.addf %189, %191 : vector<16x64xf32>
    %cst_115 = arith.constant dense<0.000000e+00> : vector<16x64xf32>
    %193 = tpu.matmul %192, %182, %cst_115 {dimension_numbers = #tpu.dot_dimension_numbers<[1], [0], [0], [1], [0, 0, 1, 1], [], []>} : vector<16x64xf32>, vector<64x64xf32>, vector<16x64xf32> -> vector<16x64xf32>
    %194 = vector.broadcast %183 : vector<1x64xf32> to vector<16x64xf32>
    %195 = arith.addf %193, %194 : vector<16x64xf32>
    %cst_116 = arith.constant 0.000000e+00 : f32
    %196 = vector.broadcast %cst_116 : f32 to vector<16x64xf32>
    %197 = arith.maximumf %195, %196 : vector<16x64xf32>
    %cst_117 = arith.constant dense<0.000000e+00> : vector<16x64xf32>
    %198 = tpu.matmul %197, %184, %cst_117 {dimension_numbers = #tpu.dot_dimension_numbers<[1], [0], [0], [1], [0, 0, 1, 1], [], []>} : vector<16x64xf32>, vector<64x64xf32>, vector<16x64xf32> -> vector<16x64xf32>
    %199 = vector.broadcast %185 : vector<1x64xf32> to vector<16x64xf32>
    %200 = arith.addf %198, %199 : vector<16x64xf32>
    %cst_118 = arith.constant 0.000000e+00 : f32
    %201 = vector.broadcast %cst_118 : f32 to vector<16x64xf32>
    %202 = arith.maximumf %200, %201 : vector<16x64xf32>
    %cst_119 = arith.constant dense<0.000000e+00> : vector<16x128xf32>
    %203 = tpu.matmul %202, %186, %cst_119 {dimension_numbers = #tpu.dot_dimension_numbers<[1], [0], [0], [1], [0, 0, 1, 1], [], []>} : vector<16x64xf32>, vector<64x128xf32>, vector<16x128xf32> -> vector<16x128xf32>
    %204 = vector.broadcast %187 : vector<1x128xf32> to vector<16x128xf32>
    %205 = arith.addf %203, %204 : vector<16x128xf32>
    %206 = arith.negf %205 : vector<16x128xf32>
    %207 = math.exp %206 : vector<16x128xf32>
    %cst_120 = arith.constant 1.000000e+00 : f32
    %208 = vector.broadcast %cst_120 : f32 to vector<16x128xf32>
    %209 = arith.addf %208, %207 : vector<16x128xf32>
    %210 = arith.divf %208, %209 : vector<16x128xf32>
    %c0_121 = arith.constant 0 : index
    %c0_122 = arith.constant 0 : index
    %211 = vector.load %arg32[%c0_121, %c0_122] : memref<16x128xf32, #tpu.memory_space<vmem>>, vector<16x128xf32>
    tpu.vector_store %arg32[%c0_121, %c0_122], %210 {strides = array<i32>} : memref<16x128xf32, #tpu.memory_space<vmem>>, vector<16x128xf32>,
    return
  }
}

</mosaic_0001>

<llo_original>
// kernel: tpu_custom_call.1
$region0: #{tpu_custom_call.1}
  #allocation0 [shape = 'u32[]', space=smem, size = 0x4, offset = 0x4, fixed_abs, tag = 'smem constant byte address 0x4 - core index']
  #allocation1 [shape = 'u32[72,128]{1,0:T(1,128)}', space=vmem, size = 0x9000, scoped, tag = 'internal scratch']
  %s0 = inlined_call_operand.smem [shape: u32[33], index: -1, kind: input, shape index: {}]
  %s1 = sld [smem:[%s0]]
  %s2 = scalar_lea.smem %s0, 1
  %s3 = sld [smem:[%s2]]
  %s4 = scalar_lea.smem %s0, 2
  %s5 = sld [smem:[%s4]]
  %s6 = scalar_lea.smem %s0, 3
  %s7 = sld [smem:[%s6]]
  %s8 = scalar_lea.smem %s0, 4
  %s9 = sld [smem:[%s8]]
  %s10 = scalar_lea.smem %s0, 5
  %s11 = sld [smem:[%s10]]
  %s12 = scalar_lea.smem %s0, 6
  %s13 = sld [smem:[%s12]]
  %s14 = scalar_lea.smem %s0, 7
  %s15 = sld [smem:[%s14]]
  %s16 = scalar_lea.smem %s0, 8
  %s17 = sld [smem:[%s16]]
  %s18 = scalar_lea.smem %s0, 9
  %s19 = sld [smem:[%s18]]
  %s20 = scalar_lea.smem %s0, 10
  %s21 = sld [smem:[%s20]]
  %s22 = scalar_lea.smem %s0, 11
  %s23 = sld [smem:[%s22]]
  %s24 = scalar_lea.smem %s0, 12
  %s25 = sld [smem:[%s24]]
  %s26 = scalar_lea.smem %s0, 13
  %s27 = sld [smem:[%s26]]
  %s28 = scalar_lea.smem %s0, 14
  %s29 = sld [smem:[%s28]]
  %s30 = scalar_lea.smem %s0, 15
  %s31 = sld [smem:[%s30]]
  %s32 = scalar_lea.smem %s0, 16
  %s33 = sld [smem:[%s32]]
  %s34 = scalar_lea.smem %s0, 17
  %s35 = sld [smem:[%s34]]
  %s36 = scalar_lea.smem %s0, 18
  %s37 = sld [smem:[%s36]]
  %s38 = scalar_lea.smem %s0, 19
  %s39 = sld [smem:[%s38]]
  %s40 = scalar_lea.smem %s0, 20
  %s41 = sld [smem:[%s40]]
  %s42 = scalar_lea.smem %s0, 21
  %s43 = sld [smem:[%s42]]
  %s44 = scalar_lea.smem %s0, 22
  %s45 = sld [smem:[%s44]]
  %s46 = scalar_lea.smem %s0, 23
  %s47 = sld [smem:[%s46]]
  %s48 = scalar_lea.smem %s0, 24
  %s49 = sld [smem:[%s48]]
  %s50 = scalar_lea.smem %s0, 25
  %s51 = sld [smem:[%s50]]
  %s52 = scalar_lea.smem %s0, 26
  %s53 = sld [smem:[%s52]]
  %s54 = scalar_lea.smem %s0, 27
  %s55 = sld [smem:[%s54]]
  %s56 = scalar_lea.smem %s0, 28
  %s57 = sld [smem:[%s56]]
  %s58 = scalar_lea.smem %s0, 29
  %s59 = sld [smem:[%s58]]
  %s60 = scalar_lea.smem %s0, 30
  %s61 = sld [smem:[%s60]]
  %s62 = scalar_lea.smem %s0, 31
  %s63 = sld [smem:[%s62]]
  %s64 = scalar_lea.smem %s0, 32
  %s65 = sld [smem:[%s64]]
  %s66 = sld [smem:[#allocation0]]
  $region194: #{tpu_custom_call.1} parent=0
    _
  %s68 = ssub.s32 1, %s66
  %s69 = scalar_select 0, %s68, %s66
  $region1: #{tpu_custom_call.1} parent=0
    #allocation2 [shape = 'u8[32768]{0}', space=vmem, size = 0x8000, scoped, tag = 'input window, operand 4, single buffered']
    #allocation3 [shape = 's32[1]{0}', space=sflag, size = 0x4, scoped, tag = 'scoped memory for tpu_custom_call.1']
    #allocation4 [shape = 's32[1]{0}', space=sflag, size = 0x4, scoped, tag = 'scoped memory for tpu_custom_call.1']
    #allocation5 [shape = 'u8[32768]{0}', space=vmem, size = 0x8000, scoped, tag = 'input window, operand 6, single buffered']
    #allocation6 [shape = 's32[1]{0}', space=sflag, size = 0x4, scoped, tag = 'scoped memory for tpu_custom_call.1']
    #allocation7 [shape = 'u8[32768]{0}', space=vmem, size = 0x8000, scoped, tag = 'input window, operand 8, single buffered']
    #allocation8 [shape = 'u8[32768]{0}', space=vmem, size = 0x8000, scoped, tag = 'input window, operand 10, single buffered']
    #allocation9 [shape = 's32[1]{0}', space=sflag, size = 0x4, scoped, tag = 'scoped memory for tpu_custom_call.1']
    #allocation10 [shape = 'u8[32768]{0}', space=vmem, size = 0x8000, scoped, tag = 'input window, operand 12, single buffered']
    #allocation11 [shape = 'u8[32768]{0}', space=vmem, size = 0x8000, scoped, tag = 'input window, operand 14, single buffered']
    #allocation12 [shape = 's32[1]{0}', space=sflag, size = 0x4, scoped, tag = 'scoped memory for tpu_custom_call.1']
    #allocation13 [shape = 'u8[32768]{0}', space=vmem, size = 0x8000, scoped, tag = 'input window, operand 16, single buffered']
    #allocation14 [shape = 'u8[32768]{0}', space=vmem, size = 0x8000, scoped, tag = 'input window, operand 18, single buffered']
    #allocation15 [shape = 's32[1]{0}', space=sflag, size = 0x4, scoped, tag = 'scoped memory for tpu_custom_call.1']
    #allocation16 [shape = 'u8[32768]{0}', space=vmem, size = 0x8000, scoped, tag = 'input window, operand 20, single buffered']
    #allocation17 [shape = 'u8[32768]{0}', space=vmem, size = 0x8000, scoped, tag = 'input window, operand 22, single buffered']
    #allocation18 [shape = 's32[1]{0}', space=sflag, size = 0x4, scoped, tag = 'scoped memory for tpu_custom_call.1']
    #allocation19 [shape = 'u8[32768]{0}', space=vmem, size = 0x8000, scoped, tag = 'input window, operand 24, single buffered']
    #allocation20 [shape = 'u8[32768]{0}', space=vmem, size = 0x8000, scoped, tag = 'input window, operand 26, single buffered']
    #allocation21 [shape = 's32[1]{0}', space=sflag, size = 0x4, scoped, tag = 'scoped memory for tpu_custom_call.1']
    #allocation22 [shape = 'u8[32768]{0}', space=vmem, size = 0x8000, scoped, tag = 'input window, operand 28, single buffered']
    #allocation23 [shape = 'u8[32768]{0}', space=vmem, size = 0x8000, scoped, tag = 'input window, operand 30, single buffered']
    #allocation24 [shape = 's32[1]{0}', space=sflag, size = 0x4, scoped, tag = 'scoped memory for tpu_custom_call.1']
    #allocation25 [shape = 'u8[8192]{0}', space=vmem, size = 0x2000, scoped, tag = 'output window, operand 0, single buffered']
    %70 = vsyncpa [#allocation3], 0
    %71 = vsyncpa [#allocation6], 0
    %72 = vsyncpa [#allocation9], 0
    %73 = vsyncpa [#allocation12], 0
    %74 = vsyncpa [#allocation15], 0
    %75 = vsyncpa [#allocation18], 0
    %76 = vsyncpa [#allocation21], 0
    %77 = vsyncpa [#allocation24], 0
    %78 = vsyncpa [#allocation4], 0
    // Predicated region
    $region2: #{tpu_custom_call.1} parent=1 // pred_check
      _
    $region3: #{tpu_custom_call.1} parent=1 // pred_check_branch
      %80 = sbr.rel (0) target = $region5
    $region4: #{tpu_custom_call.1} parent=1 // pred_region
      _
    $region5: #{tpu_custom_call.1} parent=1 // pred_fallthru
      _
    // Predicated region
    $region6: #{tpu_custom_call.1} parent=1 // pred_check
      _
    $region7: #{tpu_custom_call.1} parent=1 // pred_check_branch
      %82 = sbr.rel (0) target = $region9
    $region8: #{tpu_custom_call.1} parent=1 // pred_region
      _
    $region9: #{tpu_custom_call.1} parent=1 // pred_fallthru
      _
    // Predicated region
    $region10: #{tpu_custom_call.1} parent=1 // pred_check
      _
    $region11: #{tpu_custom_call.1} parent=1 // pred_check_branch
      %84 = sbr.rel (0) target = $region13
    $region12: #{tpu_custom_call.1} parent=1 // pred_region
      _
    $region13: #{tpu_custom_call.1} parent=1 // pred_fallthru
      _
    // Predicated region
    $region14: #{tpu_custom_call.1} parent=1 // pred_check
      _
    $region15: #{tpu_custom_call.1} parent=1 // pred_check_branch
      %86 = sbr.rel (0) target = $region17
    $region16: #{tpu_custom_call.1} parent=1 // pred_region
      _
    $region17: #{tpu_custom_call.1} parent=1 // pred_fallthru
      _
    // Predicated region
    $region18: #{tpu_custom_call.1} parent=1 // pred_check
      _
    $region19: #{tpu_custom_call.1} parent=1 // pred_check_branch
      %88 = sbr.rel (0) target = $region21
    $region20: #{tpu_custom_call.1} parent=1 // pred_region
      %90 = vsyncadd [#allocation3], 0
      %s91 = sshll.u32 %s9, 4
      %s92 = int_to_ptr.hbm [resolvable:$true] %s91
      %s93 = sshll.u32 [#allocation2], 4
      %s94 = int_to_ptr.vmem [resolvable:$true] %s93
      %99 = dma.hbm_to_vmem [thread:$0]  %s92, 1024, %s94, [#allocation3], 128, 128, 8
    $region21: #{tpu_custom_call.1} parent=1 // pred_fallthru
      _
    // Predicated region
    $region22: #{tpu_custom_call.1} parent=1 // pred_check
      _
    $region23: #{tpu_custom_call.1} parent=1 // pred_check_branch
      %101 = sbr.rel (0) target = $region25
    $region24: #{tpu_custom_call.1} parent=1 // pred_region
      _
    $region25: #{tpu_custom_call.1} parent=1 // pred_fallthru
      _
    // Predicated region
    $region26: #{tpu_custom_call.1} parent=1 // pred_check
      _
    $region27: #{tpu_custom_call.1} parent=1 // pred_check_branch
      %103 = sbr.rel (0) target = $region29
    $region28: #{tpu_custom_call.1} parent=1 // pred_region
      %105 = vsyncadd [#allocation6], 0
      %s106 = sshll.u32 %s13, 4
      %s107 = int_to_ptr.hbm [resolvable:$true] %s106
      %s108 = sshll.u32 [#allocation5], 4
      %s109 = int_to_ptr.vmem [resolvable:$true] %s108
      %114 = dma.hbm_to_vmem [thread:$0]  %s107, 1024, %s109, [#allocation6], 128, 128, 8
    $region29: #{tpu_custom_call.1} parent=1 // pred_fallthru
      _
    // Predicated region
    $region30: #{tpu_custom_call.1} parent=1 // pred_check
      _
    $region31: #{tpu_custom_call.1} parent=1 // pred_check_branch
      %116 = sbr.rel (0) target = $region33
    $region32: #{tpu_custom_call.1} parent=1 // pred_region
      _
    $region33: #{tpu_custom_call.1} parent=1 // pred_fallthru
      _
    // Predicated region
    $region34: #{tpu_custom_call.1} parent=1 // pred_check
      _
    $region35: #{tpu_custom_call.1} parent=1 // pred_check_branch
      %118 = sbr.rel (0) target = $region37
    $region36: #{tpu_custom_call.1} parent=1 // pred_region
      %120 = vsyncadd [#allocation6], 0
      %s121 = sshll.u32 %s17, 4
      %s122 = int_to_ptr.hbm [resolvable:$true] %s121
      %s123 = sshll.u32 [#allocation7], 4
      %s124 = int_to_ptr.vmem [resolvable:$true] %s123
      %129 = dma.hbm_to_vmem [thread:$0]  %s122, 1024, %s124, [#allocation6], 128, 128, 8
    $region37: #{tpu_custom_call.1} parent=1 // pred_fallthru
      _
    // Predicated region
    $region38: #{tpu_custom_call.1} parent=1 // pred_check
      _
    $region39: #{tpu_custom_call.1} parent=1 // pred_check_branch
      %131 = sbr.rel (0) target = $region41
    $region40: #{tpu_custom_call.1} parent=1 // pred_region
      _
    $region41: #{tpu_custom_call.1} parent=1 // pred_fallthru
      _
    // Predicated region
    $region42: #{tpu_custom_call.1} parent=1 // pred_check
      _
    $region43: #{tpu_custom_call.1} parent=1 // pred_check_branch
      %133 = sbr.rel (0) target = $region45
    $region44: #{tpu_custom_call.1} parent=1 // pred_region
      %135 = vsyncadd [#allocation9], 0
      %s136 = sshll.u32 %s21, 4
      %s137 = int_to_ptr.hbm [resolvable:$true] %s136
      %s138 = sshll.u32 [#allocation8], 4
      %s139 = int_to_ptr.vmem [resolvable:$true] %s138
      %144 = dma.hbm_to_vmem [thread:$0]  %s137, 1024, %s139, [#allocation9], 128, 128, 8
    $region45: #{tpu_custom_call.1} parent=1 // pred_fallthru
      _
    // Predicated region
    $region46: #{tpu_custom_call.1} parent=1 // pred_check
      _
    $region47: #{tpu_custom_call.1} parent=1 // pred_check_branch
      %146 = sbr.rel (0) target = $region49
    $region48: #{tpu_custom_call.1} parent=1 // pred_region
      _
    $region49: #{tpu_custom_call.1} parent=1 // pred_fallthru
      _
    // Predicated region
    $region50: #{tpu_custom_call.1} parent=1 // pred_check
      _
    $region51: #{tpu_custom_call.1} parent=1 // pred_check_branch
      %148 = sbr.rel (0) target = $region53
    $region52: #{tpu_custom_call.1} parent=1 // pred_region
      %150 = vsyncadd [#allocation9], 0
      %s151 = sshll.u32 %s25, 4
      %s152 = int_to_ptr.hbm [resolvable:$true] %s151
      %s153 = sshll.u32 [#allocation10], 4
      %s154 = int_to_ptr.vmem [resolvable:$true] %s153
      %159 = dma.hbm_to_vmem [thread:$0]  %s152, 1024, %s154, [#allocation9], 128, 128, 8
    $region53: #{tpu_custom_call.1} parent=1 // pred_fallthru
      _
    // Predicated region
    $region54: #{tpu_custom_call.1} parent=1 // pred_check
      _
    $region55: #{tpu_custom_call.1} parent=1 // pred_check_branch
      %161 = sbr.rel (0) target = $region57
    $region56: #{tpu_custom_call.1} parent=1 // pred_region
      _
    $region57: #{tpu_custom_call.1} parent=1 // pred_fallthru
      _
    // Predicated region
    $region58: #{tpu_custom_call.1} parent=1 // pred_check
      _
    $region59: #{tpu_custom_call.1} parent=1 // pred_check_branch
      %163 = sbr.rel (0) target = $region61
    $region60: #{tpu_custom_call.1} parent=1 // pred_region
      %165 = vsyncadd [#allocation12], 0
      %s166 = sshll.u32 %s29, 4
      %s167 = int_to_ptr.hbm [resolvable:$true] %s166
      %s168 = sshll.u32 [#allocation11], 4
      %s169 = int_to_ptr.vmem [resolvable:$true] %s168
      %174 = dma.hbm_to_vmem [thread:$0]  %s167, 1024, %s169, [#allocation12], 128, 128, 8
    $region61: #{tpu_custom_call.1} parent=1 // pred_fallthru
      _
    // Predicated region
    $region62: #{tpu_custom_call.1} parent=1 // pred_check
      _
    $region63: #{tpu_custom_call.1} parent=1 // pred_check_branch
      %176 = sbr.rel (0) target = $region65
    $region64: #{tpu_custom_call.1} parent=1 // pred_region
      _
    $region65: #{tpu_custom_call.1} parent=1 // pred_fallthru
      _
    // Predicated region
    $region66: #{tpu_custom_call.1} parent=1 // pred_check
      _
    $region67: #{tpu_custom_call.1} parent=1 // pred_check_branch
      %178 = sbr.rel (0) target = $region69
    $region68: #{tpu_custom_call.1} parent=1 // pred_region
      %180 = vsyncadd [#allocation12], 0
      %s181 = sshll.u32 %s33, 4
      %s182 = int_to_ptr.hbm [resolvable:$true] %s181
      %s183 = sshll.u32 [#allocation13], 4
      %s184 = int_to_ptr.vmem [resolvable:$true] %s183
      %189 = dma.hbm_to_vmem [thread:$0]  %s182, 1024, %s184, [#allocation12], 128, 128, 8
    $region69: #{tpu_custom_call.1} parent=1 // pred_fallthru
      _
    // Predicated region
    $region70: #{tpu_custom_call.1} parent=1 // pred_check
      _
    $region71: #{tpu_custom_call.1} parent=1 // pred_check_branch
      %191 = sbr.rel (0) target = $region73
    $region72: #{tpu_custom_call.1} parent=1 // pred_region
      _
    $region73: #{tpu_custom_call.1} parent=1 // pred_fallthru
      _
    // Predicated region
    $region74: #{tpu_custom_call.1} parent=1 // pred_check
      _
    $region75: #{tpu_custom_call.1} parent=1 // pred_check_branch
      %193 = sbr.rel (0) target = $region77
    $region76: #{tpu_custom_call.1} parent=1 // pred_region
      %195 = vsyncadd [#allocation15], 0
      %s196 = sshll.u32 %s37, 4
      %s197 = int_to_ptr.hbm [resolvable:$true] %s196
      %s198 = sshll.u32 [#allocation14], 4
      %s199 = int_to_ptr.vmem [resolvable:$true] %s198
      %204 = dma.hbm_to_vmem [thread:$0]  %s197, 1024, %s199, [#allocation15], 128, 128, 8
    $region77: #{tpu_custom_call.1} parent=1 // pred_fallthru
      _
    // Predicated region
    $region78: #{tpu_custom_call.1} parent=1 // pred_check
      _
    $region79: #{tpu_custom_call.1} parent=1 // pred_check_branch
      %206 = sbr.rel (0) target = $region81
    $region80: #{tpu_custom_call.1} parent=1 // pred_region
      _
    $region81: #{tpu_custom_call.1} parent=1 // pred_fallthru
      _
    // Predicated region
    $region82: #{tpu_custom_call.1} parent=1 // pred_check
      _
    $region83: #{tpu_custom_call.1} parent=1 // pred_check_branch
      %208 = sbr.rel (0) target = $region85
    $region84: #{tpu_custom_call.1} parent=1 // pred_region
      %210 = vsyncadd [#allocation15], 0
      %s211 = sshll.u32 %s41, 4
      %s212 = int_to_ptr.hbm [resolvable:$true] %s211
      %s213 = sshll.u32 [#allocation16], 4
      %s214 = int_to_ptr.vmem [resolvable:$true] %s213
      %219 = dma.hbm_to_vmem [thread:$0]  %s212, 1024, %s214, [#allocation15], 128, 128, 8
    $region85: #{tpu_custom_call.1} parent=1 // pred_fallthru
      _
    // Predicated region
    $region86: #{tpu_custom_call.1} parent=1 // pred_check
      _
    $region87: #{tpu_custom_call.1} parent=1 // pred_check_branch
      %221 = sbr.rel (0) target = $region89
    $region88: #{tpu_custom_call.1} parent=1 // pred_region
      _
    $region89: #{tpu_custom_call.1} parent=1 // pred_fallthru
      _
    // Predicated region
    $region90: #{tpu_custom_call.1} parent=1 // pred_check
      _
    $region91: #{tpu_custom_call.1} parent=1 // pred_check_branch
      %223 = sbr.rel (0) target = $region93
    $region92: #{tpu_custom_call.1} parent=1 // pred_region
      %225 = vsyncadd [#allocation18], 0
      %s226 = sshll.u32 %s45, 4
      %s227 = int_to_ptr.hbm [resolvable:$true] %s226
      %s228 = sshll.u32 [#allocation17], 4
      %s229 = int_to_ptr.vmem [resolvable:$true] %s228
      %234 = dma.hbm_to_vmem [thread:$0]  %s227, 1024, %s229, [#allocation18], 128, 128, 8
    $region93: #{tpu_custom_call.1} parent=1 // pred_fallthru
      _
    // Predicated region
    $region94: #{tpu_custom_call.1} parent=1 // pred_check
      _
    $region95: #{tpu_custom_call.1} parent=1 // pred_check_branch
      %236 = sbr.rel (0) target = $region97
    $region96: #{tpu_custom_call.1} parent=1 // pred_region
      _
    $region97: #{tpu_custom_call.1} parent=1 // pred_fallthru
      _
    // Predicated region
    $region98: #{tpu_custom_call.1} parent=1 // pred_check
      _
    $region99: #{tpu_custom_call.1} parent=1 // pred_check_branch
      %238 = sbr.rel (0) target = $region101
    $region100: #{tpu_custom_call.1} parent=1 // pred_region
      %240 = vsyncadd [#allocation18], 0
      %s241 = sshll.u32 %s49, 4
      %s242 = int_to_ptr.hbm [resolvable:$true] %s241
      %s243 = sshll.u32 [#allocation19], 4
      %s244 = int_to_ptr.vmem [resolvable:$true] %s243
      %249 = dma.hbm_to_vmem [thread:$0]  %s242, 1024, %s244, [#allocation18], 128, 128, 8
    $region101: #{tpu_custom_call.1} parent=1 // pred_fallthru
      _
    // Predicated region
    $region102: #{tpu_custom_call.1} parent=1 // pred_check
      _
    $region103: #{tpu_custom_call.1} parent=1 // pred_check_branch
      %251 = sbr.rel (0) target = $region105
    $region104: #{tpu_custom_call.1} parent=1 // pred_region
      _
    $region105: #{tpu_custom_call.1} parent=1 // pred_fallthru
      _
    // Predicated region
    $region106: #{tpu_custom_call.1} parent=1 // pred_check
      _
    $region107: #{tpu_custom_call.1} parent=1 // pred_check_branch
      %253 = sbr.rel (0) target = $region109
    $region108: #{tpu_custom_call.1} parent=1 // pred_region
      %255 = vsyncadd [#allocation21], 0
      %s256 = sshll.u32 %s53, 4
      %s257 = int_to_ptr.hbm [resolvable:$true] %s256
      %s258 = sshll.u32 [#allocation20], 4
      %s259 = int_to_ptr.vmem [resolvable:$true] %s258
      %264 = dma.hbm_to_vmem [thread:$0]  %s257, 1024, %s259, [#allocation21], 128, 128, 8
    $region109: #{tpu_custom_call.1} parent=1 // pred_fallthru
      _
    // Predicated region
    $region110: #{tpu_custom_call.1} parent=1 // pred_check
      _
    $region111: #{tpu_custom_call.1} parent=1 // pred_check_branch
      %266 = sbr.rel (0) target = $region113
    $region112: #{tpu_custom_call.1} parent=1 // pred_region
      _
    $region113: #{tpu_custom_call.1} parent=1 // pred_fallthru
      _
    // Predicated region
    $region114: #{tpu_custom_call.1} parent=1 // pred_check
      _
    $region115: #{tpu_custom_call.1} parent=1 // pred_check_branch
      %268 = sbr.rel (0) target = $region117
    $region116: #{tpu_custom_call.1} parent=1 // pred_region
      %270 = vsyncadd [#allocation21], 0
      %s271 = sshll.u32 %s57, 4
      %s272 = int_to_ptr.hbm [resolvable:$true] %s271
      %s273 = sshll.u32 [#allocation22], 4
      %s274 = int_to_ptr.vmem [resolvable:$true] %s273
      %279 = dma.hbm_to_vmem [thread:$0]  %s272, 1024, %s274, [#allocation21], 128, 128, 8
    $region117: #{tpu_custom_call.1} parent=1 // pred_fallthru
      _
    // Predicated region
    $region118: #{tpu_custom_call.1} parent=1 // pred_check
      _
    $region119: #{tpu_custom_call.1} parent=1 // pred_check_branch
      %281 = sbr.rel (0) target = $region121
    $region120: #{tpu_custom_call.1} parent=1 // pred_region
      _
    $region121: #{tpu_custom_call.1} parent=1 // pred_fallthru
      _
    // Predicated region
    $region122: #{tpu_custom_call.1} parent=1 // pred_check
      _
    $region123: #{tpu_custom_call.1} parent=1 // pred_check_branch
      %283 = sbr.rel (0) target = $region125
    $region124: #{tpu_custom_call.1} parent=1 // pred_region
      %285 = vsyncadd [#allocation24], 0
      %s286 = sshll.u32 %s61, 4
      %s287 = int_to_ptr.hbm [resolvable:$true] %s286
      %s288 = sshll.u32 [#allocation23], 4
      %s289 = int_to_ptr.vmem [resolvable:$true] %s288
      %294 = dma.hbm_to_vmem [thread:$0]  %s287, 1024, %s289, [#allocation24], 128, 128, 8
    $region125: #{tpu_custom_call.1} parent=1 // pred_fallthru
      _
    // Predicated region
    $region126: #{tpu_custom_call.1} parent=1 // pred_check
      _
    $region127: #{tpu_custom_call.1} parent=1 // pred_check_branch
      %296 = sbr.rel (0) target = $region129
    $region128: #{tpu_custom_call.1} parent=1 // pred_region
      _
    $region129: #{tpu_custom_call.1} parent=1 // pred_fallthru
      _
    // Predicated region
    $region130: #{tpu_custom_call.1} parent=1 // pred_check
      _
    $region131: #{tpu_custom_call.1} parent=1 // pred_check_branch
      %298 = sbr.rel (0) target = $region133
    $region132: #{tpu_custom_call.1} parent=1 // pred_region
      %300 = dma.done [#allocation3], 1024
    $region133: #{tpu_custom_call.1} parent=1 // pred_fallthru
      _
    // Predicated region
    $region134: #{tpu_custom_call.1} parent=1 // pred_check
      _
    $region135: #{tpu_custom_call.1} parent=1 // pred_check_branch
      %302 = sbr.rel (0) target = $region137
    $region136: #{tpu_custom_call.1} parent=1 // pred_region
      %304 = dma.done [#allocation6], 1024
    $region137: #{tpu_custom_call.1} parent=1 // pred_fallthru
      _
    // Predicated region
    $region138: #{tpu_custom_call.1} parent=1 // pred_check
      _
    $region139: #{tpu_custom_call.1} parent=1 // pred_check_branch
      %306 = sbr.rel (0) target = $region141
    $region140: #{tpu_custom_call.1} parent=1 // pred_region
      %308 = dma.done [#allocation6], 1024
    $region141: #{tpu_custom_call.1} parent=1 // pred_fallthru
      _
    // Predicated region
    $region142: #{tpu_custom_call.1} parent=1 // pred_check
      _
    $region143: #{tpu_custom_call.1} parent=1 // pred_check_branch
      %310 = sbr.rel (0) target = $region145
    $region144: #{tpu_custom_call.1} parent=1 // pred_region
      %312 = dma.done [#allocation9], 1024
    $region145: #{tpu_custom_call.1} parent=1 // pred_fallthru
      _
    // Predicated region
    $region146: #{tpu_custom_call.1} parent=1 // pred_check
      _
    $region147: #{tpu_custom_call.1} parent=1 // pred_check_branch
      %314 = sbr.rel (0) target = $region149
    $region148: #{tpu_custom_call.1} parent=1 // pred_region
      %316 = dma.done [#allocation9], 1024
    $region149: #{tpu_custom_call.1} parent=1 // pred_fallthru
      _
    // Predicated region
    $region150: #{tpu_custom_call.1} parent=1 // pred_check
      _
    $region151: #{tpu_custom_call.1} parent=1 // pred_check_branch
      %318 = sbr.rel (0) target = $region153
    $region152: #{tpu_custom_call.1} parent=1 // pred_region
      %320 = dma.done [#allocation12], 1024
    $region153: #{tpu_custom_call.1} parent=1 // pred_fallthru
      _
    // Predicated region
    $region154: #{tpu_custom_call.1} parent=1 // pred_check
      _
    $region155: #{tpu_custom_call.1} parent=1 // pred_check_branch
      %322 = sbr.rel (0) target = $region157
    $region156: #{tpu_custom_call.1} parent=1 // pred_region
      %324 = dma.done [#allocation12], 1024
    $region157: #{tpu_custom_call.1} parent=1 // pred_fallthru
      _
    // Predicated region
    $region158: #{tpu_custom_call.1} parent=1 // pred_check
      _
    $region159: #{tpu_custom_call.1} parent=1 // pred_check_branch
      %326 = sbr.rel (0) target = $region161
    $region160: #{tpu_custom_call.1} parent=1 // pred_region
      %328 = dma.done [#allocation15], 1024
    $region161: #{tpu_custom_call.1} parent=1 // pred_fallthru
      _
    // Predicated region
    $region162: #{tpu_custom_call.1} parent=1 // pred_check
      _
    $region163: #{tpu_custom_call.1} parent=1 // pred_check_branch
      %330 = sbr.rel (0) target = $region165
    $region164: #{tpu_custom_call.1} parent=1 // pred_region
      %332 = dma.done [#allocation15], 1024
    $region165: #{tpu_custom_call.1} parent=1 // pred_fallthru
      _
    // Predicated region
    $region166: #{tpu_custom_call.1} parent=1 // pred_check
      _
    $region167: #{tpu_custom_call.1} parent=1 // pred_check_branch
      %334 = sbr.rel (0) target = $region169
    $region168: #{tpu_custom_call.1} parent=1 // pred_region
      %336 = dma.done [#allocation18], 1024
    $region169: #{tpu_custom_call.1} parent=1 // pred_fallthru
      _
    // Predicated region
    $region170: #{tpu_custom_call.1} parent=1 // pred_check
      _
    $region171: #{tpu_custom_call.1} parent=1 // pred_check_branch
      %338 = sbr.rel (0) target = $region173
    $region172: #{tpu_custom_call.1} parent=1 // pred_region
      %340 = dma.done [#allocation18], 1024
    $region173: #{tpu_custom_call.1} parent=1 // pred_fallthru
      _
    // Predicated region
    $region174: #{tpu_custom_call.1} parent=1 // pred_check
      _
    $region175: #{tpu_custom_call.1} parent=1 // pred_check_branch
      %342 = sbr.rel (0) target = $region177
    $region176: #{tpu_custom_call.1} parent=1 // pred_region
      %344 = dma.done [#allocation21], 1024
    $region177: #{tpu_custom_call.1} parent=1 // pred_fallthru
      _
    // Predicated region
    $region178: #{tpu_custom_call.1} parent=1 // pred_check
      _
    $region179: #{tpu_custom_call.1} parent=1 // pred_check_branch
      %346 = sbr.rel (0) target = $region181
    $region180: #{tpu_custom_call.1} parent=1 // pred_region
      %348 = dma.done [#allocation21], 1024
    $region181: #{tpu_custom_call.1} parent=1 // pred_fallthru
      _
    // Predicated region
    $region182: #{tpu_custom_call.1} parent=1 // pred_check
      _
    $region183: #{tpu_custom_call.1} parent=1 // pred_check_branch
      %350 = sbr.rel (0) target = $region185
    $region184: #{tpu_custom_call.1} parent=1 // pred_region
      %352 = dma.done [#allocation24], 1024
    $region185: #{tpu_custom_call.1} parent=1 // pred_fallthru
      _
    %v354 = vld [vmem:[%s1] sm:$0xf]
    %v355 = vld [vmem:[%s1 + $0x4] sm:$0xf]
    %v356 = vld [vmem:[%s3] sm:$0xff]
    %v357 = vld [vmem:[%s3 + $0x8] sm:$0xff]
    %v358 = vld [vmem:[%s5] sm:$0x1]
    %v359 = vld [vmem:[%s7] sm:$0x1]
    %v360 = vld [vmem:[#allocation2] sm:$0xff]
    %v361 = vld [vmem:[#allocation2 + $0x8] sm:$0xff]
    %v362 = vld [vmem:[#allocation2 + $0x10] sm:$0xff]
    %v363 = vld [vmem:[#allocation2 + $0x18] sm:$0xff]
    %v364 = vld [vmem:[#allocation2 + $0x20] sm:$0xff]
    %v365 = vld [vmem:[#allocation2 + $0x28] sm:$0xff]
    %v366 = vld [vmem:[#allocation2 + $0x30] sm:$0xff]
    %v367 = vld [vmem:[#allocation2 + $0x38] sm:$0xff]
    %v368 = vld [vmem:[%s11] sm:$0x1]
    %v369 = vld [vmem:[#allocation5] sm:$0xff]
    %v370 = vld [vmem:[#allocation5 + $0x8] sm:$0xff]
    %v371 = vld [vmem:[#allocation5 + $0x10] sm:$0xff]
    %v372 = vld [vmem:[#allocation5 + $0x18] sm:$0xff]
    %v373 = vld [vmem:[#allocation5 + $0x20] sm:$0xff]
    %v374 = vld [vmem:[#allocation5 + $0x28] sm:$0xff]
    %v375 = vld [vmem:[#allocation5 + $0x30] sm:$0xff]
    %v376 = vld [vmem:[#allocation5 + $0x38] sm:$0xff]
    %v377 = vld [vmem:[%s15] sm:$0x1]
    %v378 = vpack.c.bf16 %v357, %v356
    %v381 = vunpack.c.l.b16 %v354
    %v382 = vunpack.c.l.b16 %v355
    %v383 = vpack.c.b16 %v382, %v381
    %vm384 = vcmask 130048
    %v386 = vsel %vm384, %v383, 0
    %388 = vmatpush.bf16.msra.mxu0 0
    %389 = vmatpush.bf16.msra.mxu0 0
    %390 = vmatpush.bf16.msra.mxu0 0
    %391 = vmatpush.bf16.msra.mxu0 0
    %392 = vmatpush.bf16.msra.mxu0 0
    %393 = vmatpush.bf16.msra.mxu0 0
    %394 = vmatpush.bf16.msra.mxu0 0
    %395 = vmatpush.bf16.msra.mxu0 %v378
    %396 = vmatmul.bf16.gmra.mxu0 %v386
    %v397 = vpop.f32.mrf.mxu0
    %v398 = vadd.f32 %v356, %v397
    %v399 = vpop.f32.mrf.mxu0
    %v400 = vadd.f32 %v357, %v399
    %401 = vdwg.mxu0
    %403 = vset.pattern.permute.xlu0 0
    %404 = vperm.xlu0 %403, %v398
    %v405 = vpop.permute.xlu0 %404
    %408 = vset.pattern.permute.xlu0 0
    %409 = vperm.xlu0 %408, %v400
    %v410 = vpop.permute.xlu0 %409
    %v413 = vperm.slane %v358, 0
    %v415 = vmul.f32 %v405, %v413
    %v416 = vmul.f32 %v410, %v413
    %v418 = vperm.slane %v359, 0
    %v420 = vadd.f32 %v415, %v418
    %v421 = vadd.f32 %v416, %v418
    %v422 = vmax.f32 %v420, 0.0
    %v423 = vmax.f32 %v421, 0.0
    %v425 = vperm.slane %v368, 0
    %vm427 = vcmask 523264
    %v429 = vsel %vm427, %v422, 0
    %v432 = vsel %vm427, %v423, 0
    %434 = vmatpush.msra.mxu0 0.0
    %435 = vmatpush.msra.mxu0 0.0
    %436 = vmatpush.msra.mxu0 0.0
    %437 = vmatpush.msra.mxu0 0.0
    %438 = vmatpush.msra.mxu0 0.0
    %439 = vmatpush.msra.mxu0 0.0
    %440 = vmatpush.msra.mxu0 0.0
    %441 = vmatpush.msra.mxu0 0.0
    %442 = vmatpush.msra.mxu0 %v367
    %443 = vmatpush.msra.mxu0 %v366
    %444 = vmatpush.msra.mxu0 %v365
    %445 = vmatpush.msra.mxu0 %v364
    %446 = vmatpush.msra.mxu0 %v363
    %447 = vmatpush.msra.mxu0 %v362
    %448 = vmatpush.msra.mxu0 %v361
    %449 = vmatpush.msra.mxu0 %v360
    %450 = vmatmul.f32.gmra.mxu0 %v429
    %v451 = vpop.f32.mrf.mxu0
    %v452 = vadd.f32 %v425, %v451
    %453 = vmatmul.f32.gmra.mxu0 %v432
    %v454 = vpop.f32.mrf.mxu0
    %v455 = vadd.f32 %v425, %v454
    %456 = vdwg.mxu0
    %v457 = vmax.f32 %v452, 0.0
    %v458 = vmax.f32 %v455, 0.0
    %v460 = vperm.slane %v377, 0
    %v463 = vsel %vm427, %v457, 0
    %v466 = vsel %vm427, %v458, 0
    %468 = vmatpush.msra.mxu0 0.0
    %469 = vmatpush.msra.mxu0 0.0
    %470 = vmatpush.msra.mxu0 0.0
    %471 = vmatpush.msra.mxu0 0.0
    %472 = vmatpush.msra.mxu0 0.0
    %473 = vmatpush.msra.mxu0 0.0
    %474 = vmatpush.msra.mxu0 0.0
    %475 = vmatpush.msra.mxu0 0.0
    %476 = vmatpush.msra.mxu0 %v376
    %477 = vmatpush.msra.mxu0 %v375
    %478 = vmatpush.msra.mxu0 %v374
    %479 = vmatpush.msra.mxu0 %v373
    %480 = vmatpush.msra.mxu0 %v372
    %481 = vmatpush.msra.mxu0 %v371
    %482 = vmatpush.msra.mxu0 %v370
    %483 = vmatpush.msra.mxu0 %v369
    %484 = vmatmul.f32.gmra.mxu0 %v463
    %v485 = vpop.f32.mrf.mxu0
    %v486 = vadd.f32 %v460, %v485
    %487 = vmatmul.f32.gmra.mxu0 %v466
    %v488 = vpop.f32.mrf.mxu0
    %v489 = vadd.f32 %v460, %v488
    %490 = vdwg.mxu0
    %v491 = vsel %vm427, %v486, 0.0
    %v492 = vsel %vm427, %v489, 0.0
    %v493 = vadd.f32 %v491, %v492
    %v494 = vrot.slane %v493, 4
    %v495 = vadd.f32 %v493, %v494
    %v496 = vrot.slane %v495, 2
    %v497 = vadd.f32 %v495, %v496
    %v498 = vrot.slane %v497, 1
    %v499 = vadd.f32 %v497, %v498
    %v500 = vmul.f32 %v486, %v486
    %v501 = vmul.f32 %v489, %v489
    %v502 = vsel %vm427, %v500, 0.0
    %v503 = vsel %vm427, %v501, 0.0
    %v504 = vadd.f32 %v502, %v503
    %v505 = vrot.slane %v504, 4
    %v506 = vadd.f32 %v504, %v505
    %v507 = vrot.slane %v506, 2
    %v508 = vadd.f32 %v506, %v507
    %v509 = vrot.slane %v508, 1
    %v510 = vadd.f32 %v508, %v509
    %v511 = vmul.f32 %v499, 0.0625
    %v512 = vmul.f32 %v510, 0.0625
    %v513 = vmul.f32 %v511, %v511
    %v514 = vsub.f32 %v512, %v513
    %v515 = vsub.f32 %v486, %v511
    %v516 = vsub.f32 %v489, %v511
    %v517 = vadd.f32 %v514, 1e-05
    %v518 = vrsqrt.pop %v517
    %v519 = vmul.f32 %v518, %v517
    %v520 = vmul.f32 %v519, %v518
    %v521 = vmul.f32 0.5, %v520
    %v522 = vsub.f32 1.5, %v521
    %v523 = vmul.f32 %v518, %v522
    %vm524 = vweird.f32 %v517
    %vm525 = vweird.f32 %v518
    %vm526 = vmor %vm524, %vm525
    %v527 = vsel %vm526, %v518, %v523
    %v528 = vmul.f32 %v515, %v527
    %v529 = vmul.f32 %v516, %v527
    %v530 = vmax.f32 %v528, 0.0
    %v531 = vmax.f32 %v529, 0.0
    %v532 = vld [vmem:[#allocation7] sm:$0xff]
    %v533 = vld [vmem:[#allocation7 + $0x8] sm:$0xff]
    %v534 = vld [vmem:[#allocation7 + $0x10] sm:$0xff]
    %v535 = vld [vmem:[#allocation7 + $0x18] sm:$0xff]
    %v536 = vld [vmem:[#allocation7 + $0x20] sm:$0xff]
    %v537 = vld [vmem:[#allocation7 + $0x28] sm:$0xff]
    %v538 = vld [vmem:[#allocation7 + $0x30] sm:$0xff]
    %v539 = vld [vmem:[#allocation7 + $0x38] sm:$0xff]
    %v540 = vld [vmem:[%s19] sm:$0x1]
    %v541 = vld [vmem:[#allocation8] sm:$0xff]
    %v542 = vld [vmem:[#allocation8 + $0x8] sm:$0xff]
    %v543 = vld [vmem:[#allocation8 + $0x10] sm:$0xff]
    %v544 = vld [vmem:[#allocation8 + $0x18] sm:$0xff]
    %v545 = vld [vmem:[#allocation8 + $0x20] sm:$0xff]
    %v546 = vld [vmem:[#allocation8 + $0x28] sm:$0xff]
    %v547 = vld [vmem:[#allocation8 + $0x30] sm:$0xff]
    %v548 = vld [vmem:[#allocation8 + $0x38] sm:$0xff]
    %v549 = vld [vmem:[%s23] sm:$0x1]
    %v550 = vld [vmem:[#allocation10] sm:$0xff]
    %v551 = vld [vmem:[#allocation10 + $0x8] sm:$0xff]
    %v552 = vld [vmem:[#allocation10 + $0x10] sm:$0xff]
    %v553 = vld [vmem:[#allocation10 + $0x18] sm:$0xff]
    %v554 = vld [vmem:[#allocation10 + $0x20] sm:$0xff]
    %v555 = vld [vmem:[#allocation10 + $0x28] sm:$0xff]
    %v556 = vld [vmem:[#allocation10 + $0x30] sm:$0xff]
    %v557 = vld [vmem:[#allocation10 + $0x38] sm:$0xff]
    %v558 = vld [vmem:[%s27] sm:$0x1]
    %v559 = vpack.c.bf16 %v531, %v530
    %560 = vmatpush.bf16.msra.mxu0 0
    %561 = vmatpush.bf16.msra.mxu0 0
    %562 = vmatpush.bf16.msra.mxu0 0
    %563 = vmatpush.bf16.msra.mxu0 0
    %564 = vmatpush.bf16.msra.mxu0 0
    %565 = vmatpush.bf16.msra.mxu0 0
    %566 = vmatpush.bf16.msra.mxu0 0
    %567 = vmatpush.bf16.msra.mxu0 %v559
    %568 = vmatmul.bf16.gmra.mxu0 %v386
    %v569 = vpop.f32.mrf.mxu0
    %v570 = vadd.f32 %v530, %v569
    %v571 = vpop.f32.mrf.mxu0
    %v572 = vadd.f32 %v531, %v571
    %573 = vdwg.mxu0
    %v575 = vperm.slane %v540, 0
    %v578 = vsel %vm427, %v570, 0
    %v581 = vsel %vm427, %v572, 0
    %583 = vmatpush.msra.mxu0 0.0
    %584 = vmatpush.msra.mxu0 0.0
    %585 = vmatpush.msra.mxu0 0.0
    %586 = vmatpush.msra.mxu0 0.0
    %587 = vmatpush.msra.mxu0 0.0
    %588 = vmatpush.msra.mxu0 0.0
    %589 = vmatpush.msra.mxu0 0.0
    %590 = vmatpush.msra.mxu0 0.0
    %591 = vmatpush.msra.mxu0 %v539
    %592 = vmatpush.msra.mxu0 %v538
    %593 = vmatpush.msra.mxu0 %v537
    %594 = vmatpush.msra.mxu0 %v536
    %595 = vmatpush.msra.mxu0 %v535
    %596 = vmatpush.msra.mxu0 %v534
    %597 = vmatpush.msra.mxu0 %v533
    %598 = vmatpush.msra.mxu0 %v532
    %599 = vmatmul.f32.gmra.mxu0 %v578
    %v600 = vpop.f32.mrf.mxu0
    %v601 = vadd.f32 %v575, %v600
    %602 = vmatmul.f32.gmra.mxu0 %v581
    %v603 = vpop.f32.mrf.mxu0
    %v604 = vadd.f32 %v575, %v603
    %605 = vdwg.mxu0
    %v606 = vmax.f32 %v601, 0.0
    %v607 = vmax.f32 %v604, 0.0
    %v609 = vperm.slane %v549, 0
    %v612 = vsel %vm427, %v606, 0
    %v615 = vsel %vm427, %v607, 0
    %617 = vmatpush.msra.mxu0 0.0
    %618 = vmatpush.msra.mxu0 0.0
    %619 = vmatpush.msra.mxu0 0.0
    %620 = vmatpush.msra.mxu0 0.0
    %621 = vmatpush.msra.mxu0 0.0
    %622 = vmatpush.msra.mxu0 0.0
    %623 = vmatpush.msra.mxu0 0.0
    %624 = vmatpush.msra.mxu0 0.0
    %625 = vmatpush.msra.mxu0 %v548
    %626 = vmatpush.msra.mxu0 %v547
    %627 = vmatpush.msra.mxu0 %v546
    %628 = vmatpush.msra.mxu0 %v545
    %629 = vmatpush.msra.mxu0 %v544
    %630 = vmatpush.msra.mxu0 %v543
    %631 = vmatpush.msra.mxu0 %v542
    %632 = vmatpush.msra.mxu0 %v541
    %633 = vmatmul.f32.gmra.mxu0 %v612
    %v634 = vpop.f32.mrf.mxu0
    %v635 = vadd.f32 %v609, %v634
    %636 = vmatmul.f32.gmra.mxu0 %v615
    %v637 = vpop.f32.mrf.mxu0
    %v638 = vadd.f32 %v609, %v637
    %639 = vdwg.mxu0
    %v640 = vmax.f32 %v635, 0.0
    %v641 = vmax.f32 %v638, 0.0
    %v643 = vperm.slane %v558, 0
    %v646 = vsel %vm427, %v640, 0
    %v649 = vsel %vm427, %v641, 0
    %651 = vmatpush.msra.mxu0 0.0
    %652 = vmatpush.msra.mxu0 0.0
    %653 = vmatpush.msra.mxu0 0.0
    %654 = vmatpush.msra.mxu0 0.0
    %655 = vmatpush.msra.mxu0 0.0
    %656 = vmatpush.msra.mxu0 0.0
    %657 = vmatpush.msra.mxu0 0.0
    %658 = vmatpush.msra.mxu0 0.0
    %659 = vmatpush.msra.mxu0 %v557
    %660 = vmatpush.msra.mxu0 %v556
    %661 = vmatpush.msra.mxu0 %v555
    %662 = vmatpush.msra.mxu0 %v554
    %663 = vmatpush.msra.mxu0 %v553
    %664 = vmatpush.msra.mxu0 %v552
    %665 = vmatpush.msra.mxu0 %v551
    %666 = vmatpush.msra.mxu0 %v550
    %667 = vmatmul.f32.gmra.mxu0 %v646
    %v668 = vpop.f32.mrf.mxu0
    %v669 = vadd.f32 %v643, %v668
    %670 = vmatmul.f32.gmra.mxu0 %v649
    %v671 = vpop.f32.mrf.mxu0
    %v672 = vadd.f32 %v643, %v671
    %673 = vdwg.mxu0
    %v674 = vsel %vm427, %v669, 0.0
    %v675 = vsel %vm427, %v672, 0.0
    %v676 = vadd.f32 %v674, %v675
    %v677 = vrot.slane %v676, 4
    %v678 = vadd.f32 %v676, %v677
    %v679 = vrot.slane %v678, 2
    %v680 = vadd.f32 %v678, %v679
    %v681 = vrot.slane %v680, 1
    %v682 = vadd.f32 %v680, %v681
    %v683 = vmul.f32 %v669, %v669
    %v684 = vmul.f32 %v672, %v672
    %v685 = vsel %vm427, %v683, 0.0
    %v686 = vsel %vm427, %v684, 0.0
    %v687 = vadd.f32 %v685, %v686
    %v688 = vrot.slane %v687, 4
    %v689 = vadd.f32 %v687, %v688
    %v690 = vrot.slane %v689, 2
    %v691 = vadd.f32 %v689, %v690
    %v692 = vrot.slane %v691, 1
    %v693 = vadd.f32 %v691, %v692
    %v694 = vmul.f32 %v682, 0.0625
    %v695 = vmul.f32 %v693, 0.0625
    %v696 = vmul.f32 %v694, %v694
    %v697 = vsub.f32 %v695, %v696
    %v698 = vsub.f32 %v669, %v694
    %v699 = vsub.f32 %v672, %v694
    %v700 = vadd.f32 %v697, 1e-05
    %v701 = vrsqrt.pop %v700
    %v702 = vmul.f32 %v701, %v700
    %v703 = vmul.f32 %v702, %v701
    %v704 = vmul.f32 0.5, %v703
    %v705 = vsub.f32 1.5, %v704
    %v706 = vmul.f32 %v701, %v705
    %vm707 = vweird.f32 %v700
    %vm708 = vweird.f32 %v701
    %vm709 = vmor %vm707, %vm708
    %v710 = vsel %vm709, %v701, %v706
    %v711 = vmul.f32 %v698, %v710
    %v712 = vmul.f32 %v699, %v710
    %v713 = vmax.f32 %v711, 0.0
    %v714 = vmax.f32 %v712, 0.0
    %v715 = vld [vmem:[#allocation11] sm:$0xff]
    %v716 = vld [vmem:[#allocation11 + $0x8] sm:$0xff]
    %v717 = vld [vmem:[#allocation11 + $0x10] sm:$0xff]
    %v718 = vld [vmem:[#allocation11 + $0x18] sm:$0xff]
    %v719 = vld [vmem:[#allocation11 + $0x20] sm:$0xff]
    %v720 = vld [vmem:[#allocation11 + $0x28] sm:$0xff]
    %v721 = vld [vmem:[#allocation11 + $0x30] sm:$0xff]
    %v722 = vld [vmem:[#allocation11 + $0x38] sm:$0xff]
    %v723 = vld [vmem:[%s31] sm:$0x1]
    %v724 = vld [vmem:[#allocation13] sm:$0xff]
    %v725 = vld [vmem:[#allocation13 + $0x8] sm:$0xff]
    %v726 = vld [vmem:[#allocation13 + $0x10] sm:$0xff]
    %v727 = vld [vmem:[#allocation13 + $0x18] sm:$0xff]
    %v728 = vld [vmem:[#allocation13 + $0x20] sm:$0xff]
    %v729 = vld [vmem:[#allocation13 + $0x28] sm:$0xff]
    %v730 = vld [vmem:[#allocation13 + $0x30] sm:$0xff]
    %v731 = vld [vmem:[#allocation13 + $0x38] sm:$0xff]
    %v732 = vld [vmem:[%s35] sm:$0x1]
    %v733 = vld [vmem:[#allocation14] sm:$0xff]
    %v734 = vld [vmem:[#allocation14 + $0x8] sm:$0xff]
    %v735 = vld [vmem:[#allocation14 + $0x10] sm:$0xff]
    %v736 = vld [vmem:[#allocation14 + $0x18] sm:$0xff]
    %v737 = vld [vmem:[#allocation14 + $0x20] sm:$0xff]
    %v738 = vld [vmem:[#allocation14 + $0x28] sm:$0xff]
    %v739 = vld [vmem:[#allocation14 + $0x30] sm:$0xff]
    %v740 = vld [vmem:[#allocation14 + $0x38] sm:$0xff]
    %v741 = vld [vmem:[%s39] sm:$0x1]
    %v742 = vpack.c.bf16 %v714, %v713
    %743 = vmatpush.bf16.msra.mxu0 0
    %744 = vmatpush.bf16.msra.mxu0 0
    %745 = vmatpush.bf16.msra.mxu0 0
    %746 = vmatpush.bf16.msra.mxu0 0
    %747 = vmatpush.bf16.msra.mxu0 0
    %748 = vmatpush.bf16.msra.mxu0 0
    %749 = vmatpush.bf16.msra.mxu0 0
    %750 = vmatpush.bf16.msra.mxu0 %v742
    %751 = vmatmul.bf16.gmra.mxu0 %v386
    %v752 = vpop.f32.mrf.mxu0
    %v753 = vadd.f32 %v713, %v752
    %v754 = vpop.f32.mrf.mxu0
    %v755 = vadd.f32 %v714, %v754
    %756 = vdwg.mxu0
    %v758 = vperm.slane %v723, 0
    %v761 = vsel %vm427, %v753, 0
    %v764 = vsel %vm427, %v755, 0
    %766 = vmatpush.msra.mxu0 0.0
    %767 = vmatpush.msra.mxu0 0.0
    %768 = vmatpush.msra.mxu0 0.0
    %769 = vmatpush.msra.mxu0 0.0
    %770 = vmatpush.msra.mxu0 0.0
    %771 = vmatpush.msra.mxu0 0.0
    %772 = vmatpush.msra.mxu0 0.0
    %773 = vmatpush.msra.mxu0 0.0
    %774 = vmatpush.msra.mxu0 %v722
    %775 = vmatpush.msra.mxu0 %v721
    %776 = vmatpush.msra.mxu0 %v720
    %777 = vmatpush.msra.mxu0 %v719
    %778 = vmatpush.msra.mxu0 %v718
    %779 = vmatpush.msra.mxu0 %v717
    %780 = vmatpush.msra.mxu0 %v716
    %781 = vmatpush.msra.mxu0 %v715
    %782 = vmatmul.f32.gmra.mxu0 %v761
    %v783 = vpop.f32.mrf.mxu0
    %v784 = vadd.f32 %v758, %v783
    %785 = vmatmul.f32.gmra.mxu0 %v764
    %v786 = vpop.f32.mrf.mxu0
    %v787 = vadd.f32 %v758, %v786
    %788 = vdwg.mxu0
    %v789 = vmax.f32 %v784, 0.0
    %v790 = vmax.f32 %v787, 0.0
    %v792 = vperm.slane %v732, 0
    %v795 = vsel %vm427, %v789, 0
    %v798 = vsel %vm427, %v790, 0
    %800 = vmatpush.msra.mxu0 0.0
    %801 = vmatpush.msra.mxu0 0.0
    %802 = vmatpush.msra.mxu0 0.0
    %803 = vmatpush.msra.mxu0 0.0
    %804 = vmatpush.msra.mxu0 0.0
    %805 = vmatpush.msra.mxu0 0.0
    %806 = vmatpush.msra.mxu0 0.0
    %807 = vmatpush.msra.mxu0 0.0
    %808 = vmatpush.msra.mxu0 %v731
    %809 = vmatpush.msra.mxu0 %v730
    %810 = vmatpush.msra.mxu0 %v729
    %811 = vmatpush.msra.mxu0 %v728
    %812 = vmatpush.msra.mxu0 %v727
    %813 = vmatpush.msra.mxu0 %v726
    %814 = vmatpush.msra.mxu0 %v725
    %815 = vmatpush.msra.mxu0 %v724
    %816 = vmatmul.f32.gmra.mxu0 %v795
    %v817 = vpop.f32.mrf.mxu0
    %v818 = vadd.f32 %v792, %v817
    %819 = vmatmul.f32.gmra.mxu0 %v798
    %v820 = vpop.f32.mrf.mxu0
    %v821 = vadd.f32 %v792, %v820
    %822 = vdwg.mxu0
    %v823 = vmax.f32 %v818, 0.0
    %v824 = vmax.f32 %v821, 0.0
    %v826 = vperm.slane %v741, 0
    %v829 = vsel %vm427, %v823, 0
    %v832 = vsel %vm427, %v824, 0
    %834 = vmatpush.msra.mxu0 0.0
    %835 = vmatpush.msra.mxu0 0.0
    %836 = vmatpush.msra.mxu0 0.0
    %837 = vmatpush.msra.mxu0 0.0
    %838 = vmatpush.msra.mxu0 0.0
    %839 = vmatpush.msra.mxu0 0.0
    %840 = vmatpush.msra.mxu0 0.0
    %841 = vmatpush.msra.mxu0 0.0
    %842 = vmatpush.msra.mxu0 %v740
    %843 = vmatpush.msra.mxu0 %v739
    %844 = vmatpush.msra.mxu0 %v738
    %845 = vmatpush.msra.mxu0 %v737
    %846 = vmatpush.msra.mxu0 %v736
    %847 = vmatpush.msra.mxu0 %v735
    %848 = vmatpush.msra.mxu0 %v734
    %849 = vmatpush.msra.mxu0 %v733
    %850 = vmatmul.f32.gmra.mxu0 %v829
    %v851 = vpop.f32.mrf.mxu0
    %v852 = vadd.f32 %v826, %v851
    %853 = vmatmul.f32.gmra.mxu0 %v832
    %v854 = vpop.f32.mrf.mxu0
    %v855 = vadd.f32 %v826, %v854
    %856 = vdwg.mxu0
    %v857 = vsel %vm427, %v852, 0.0
    %v858 = vsel %vm427, %v855, 0.0
    %v859 = vadd.f32 %v857, %v858
    %v860 = vrot.slane %v859, 4
    %v861 = vadd.f32 %v859, %v860
    %v862 = vrot.slane %v861, 2
    %v863 = vadd.f32 %v861, %v862
    %v864 = vrot.slane %v863, 1
    %v865 = vadd.f32 %v863, %v864
    %v866 = vmul.f32 %v852, %v852
    %v867 = vmul.f32 %v855, %v855
    %v868 = vsel %vm427, %v866, 0.0
    %v869 = vsel %vm427, %v867, 0.0
    %v870 = vadd.f32 %v868, %v869
    %v871 = vrot.slane %v870, 4
    %v872 = vadd.f32 %v870, %v871
    %v873 = vrot.slane %v872, 2
    %v874 = vadd.f32 %v872, %v873
    %v875 = vrot.slane %v874, 1
    %v876 = vadd.f32 %v874, %v875
    %v877 = vmul.f32 %v865, 0.0625
    %v878 = vmul.f32 %v876, 0.0625
    %v879 = vmul.f32 %v877, %v877
    %v880 = vsub.f32 %v878, %v879
    %v881 = vsub.f32 %v852, %v877
    %v882 = vsub.f32 %v855, %v877
    %v883 = vadd.f32 %v880, 1e-05
    %v884 = vrsqrt.pop %v883
    %v885 = vmul.f32 %v884, %v883
    %v886 = vmul.f32 %v885, %v884
    %v887 = vmul.f32 0.5, %v886
    %v888 = vsub.f32 1.5, %v887
    %v889 = vmul.f32 %v884, %v888
    %vm890 = vweird.f32 %v883
    %vm891 = vweird.f32 %v884
    %vm892 = vmor %vm890, %vm891
    %v893 = vsel %vm892, %v884, %v889
    %v894 = vmul.f32 %v881, %v893
    %v895 = vmul.f32 %v882, %v893
    %v896 = vmax.f32 %v894, 0.0
    %v897 = vmax.f32 %v895, 0.0
    %v898 = vld [vmem:[#allocation16] sm:$0xff]
    %v899 = vld [vmem:[#allocation16 + $0x8] sm:$0xff]
    %v900 = vld [vmem:[#allocation16 + $0x10] sm:$0xff]
    %v901 = vld [vmem:[#allocation16 + $0x18] sm:$0xff]
    %v902 = vld [vmem:[#allocation16 + $0x20] sm:$0xff]
    %v903 = vld [vmem:[#allocation16 + $0x28] sm:$0xff]
    %v904 = vld [vmem:[#allocation16 + $0x30] sm:$0xff]
    %v905 = vld [vmem:[#allocation16 + $0x38] sm:$0xff]
    %v906 = vld [vmem:[%s43] sm:$0x1]
    %v907 = vld [vmem:[#allocation17] sm:$0xff]
    %v908 = vld [vmem:[#allocation17 + $0x8] sm:$0xff]
    %v909 = vld [vmem:[#allocation17 + $0x10] sm:$0xff]
    %v910 = vld [vmem:[#allocation17 + $0x18] sm:$0xff]
    %v911 = vld [vmem:[#allocation17 + $0x20] sm:$0xff]
    %v912 = vld [vmem:[#allocation17 + $0x28] sm:$0xff]
    %v913 = vld [vmem:[#allocation17 + $0x30] sm:$0xff]
    %v914 = vld [vmem:[#allocation17 + $0x38] sm:$0xff]
    %v915 = vld [vmem:[%s47] sm:$0x1]
    %v916 = vld [vmem:[#allocation19] sm:$0xff]
    %v917 = vld [vmem:[#allocation19 + $0x8] sm:$0xff]
    %v918 = vld [vmem:[#allocation19 + $0x10] sm:$0xff]
    %v919 = vld [vmem:[#allocation19 + $0x18] sm:$0xff]
    %v920 = vld [vmem:[#allocation19 + $0x20] sm:$0xff]
    %v921 = vld [vmem:[#allocation19 + $0x28] sm:$0xff]
    %v922 = vld [vmem:[#allocation19 + $0x30] sm:$0xff]
    %v923 = vld [vmem:[#allocation19 + $0x38] sm:$0xff]
    %v924 = vld [vmem:[%s51] sm:$0x1]
    %v925 = vpack.c.bf16 %v897, %v896
    %926 = vmatpush.bf16.msra.mxu0 0
    %927 = vmatpush.bf16.msra.mxu0 0
    %928 = vmatpush.bf16.msra.mxu0 0
    %929 = vmatpush.bf16.msra.mxu0 0
    %930 = vmatpush.bf16.msra.mxu0 0
    %931 = vmatpush.bf16.msra.mxu0 0
    %932 = vmatpush.bf16.msra.mxu0 0
    %933 = vmatpush.bf16.msra.mxu0 %v925
    %934 = vmatmul.bf16.gmra.mxu0 %v386
    %v935 = vpop.f32.mrf.mxu0
    %v936 = vadd.f32 %v896, %v935
    %v937 = vpop.f32.mrf.mxu0
    %v938 = vadd.f32 %v897, %v937
    %939 = vdwg.mxu0
    %v941 = vperm.slane %v906, 0
    %v944 = vsel %vm427, %v936, 0
    %v947 = vsel %vm427, %v938, 0
    %949 = vmatpush.msra.mxu0 0.0
    %950 = vmatpush.msra.mxu0 0.0
    %951 = vmatpush.msra.mxu0 0.0
    %952 = vmatpush.msra.mxu0 0.0
    %953 = vmatpush.msra.mxu0 0.0
    %954 = vmatpush.msra.mxu0 0.0
    %955 = vmatpush.msra.mxu0 0.0
    %956 = vmatpush.msra.mxu0 0.0
    %957 = vmatpush.msra.mxu0 %v905
    %958 = vmatpush.msra.mxu0 %v904
    %959 = vmatpush.msra.mxu0 %v903
    %960 = vmatpush.msra.mxu0 %v902
    %961 = vmatpush.msra.mxu0 %v901
    %962 = vmatpush.msra.mxu0 %v900
    %963 = vmatpush.msra.mxu0 %v899
    %964 = vmatpush.msra.mxu0 %v898
    %965 = vmatmul.f32.gmra.mxu0 %v944
    %v966 = vpop.f32.mrf.mxu0
    %v967 = vadd.f32 %v941, %v966
    %968 = vmatmul.f32.gmra.mxu0 %v947
    %v969 = vpop.f32.mrf.mxu0
    %v970 = vadd.f32 %v941, %v969
    %971 = vdwg.mxu0
    %v972 = vmax.f32 %v967, 0.0
    %v973 = vmax.f32 %v970, 0.0
    %v975 = vperm.slane %v915, 0
    %v978 = vsel %vm427, %v972, 0
    %v981 = vsel %vm427, %v973, 0
    %983 = vmatpush.msra.mxu0 0.0
    %984 = vmatpush.msra.mxu0 0.0
    %985 = vmatpush.msra.mxu0 0.0
    %986 = vmatpush.msra.mxu0 0.0
    %987 = vmatpush.msra.mxu0 0.0
    %988 = vmatpush.msra.mxu0 0.0
    %989 = vmatpush.msra.mxu0 0.0
    %990 = vmatpush.msra.mxu0 0.0
    %991 = vmatpush.msra.mxu0 %v914
    %992 = vmatpush.msra.mxu0 %v913
    %993 = vmatpush.msra.mxu0 %v912
    %994 = vmatpush.msra.mxu0 %v911
    %995 = vmatpush.msra.mxu0 %v910
    %996 = vmatpush.msra.mxu0 %v909
    %997 = vmatpush.msra.mxu0 %v908
    %998 = vmatpush.msra.mxu0 %v907
    %999 = vmatmul.f32.gmra.mxu0 %v978
    %v1000 = vpop.f32.mrf.mxu0
    %v1001 = vadd.f32 %v975, %v1000
    %1002 = vmatmul.f32.gmra.mxu0 %v981
    %v1003 = vpop.f32.mrf.mxu0
    %v1004 = vadd.f32 %v975, %v1003
    %1005 = vdwg.mxu0
    %v1006 = vmax.f32 %v1001, 0.0
    %v1007 = vmax.f32 %v1004, 0.0
    %v1009 = vperm.slane %v924, 0
    %v1012 = vsel %vm427, %v1006, 0
    %v1015 = vsel %vm427, %v1007, 0
    %1017 = vmatpush.msra.mxu0 0.0
    %1018 = vmatpush.msra.mxu0 0.0
    %1019 = vmatpush.msra.mxu0 0.0
    %1020 = vmatpush.msra.mxu0 0.0
    %1021 = vmatpush.msra.mxu0 0.0
    %1022 = vmatpush.msra.mxu0 0.0
    %1023 = vmatpush.msra.mxu0 0.0
    %1024 = vmatpush.msra.mxu0 0.0
    %1025 = vmatpush.msra.mxu0 %v923
    %1026 = vmatpush.msra.mxu0 %v922
    %1027 = vmatpush.msra.mxu0 %v921
    %1028 = vmatpush.msra.mxu0 %v920
    %1029 = vmatpush.msra.mxu0 %v919
    %1030 = vmatpush.msra.mxu0 %v918
    %1031 = vmatpush.msra.mxu0 %v917
    %1032 = vmatpush.msra.mxu0 %v916
    %1033 = vmatmul.f32.gmra.mxu0 %v1012
    %v1034 = vpop.f32.mrf.mxu0
    %v1035 = vadd.f32 %v1009, %v1034
    %1036 = vmatmul.f32.gmra.mxu0 %v1015
    %v1037 = vpop.f32.mrf.mxu0
    %v1038 = vadd.f32 %v1009, %v1037
    %1039 = vdwg.mxu0
    %v1040 = vsel %vm427, %v1035, 0.0
    %v1041 = vsel %vm427, %v1038, 0.0
    %v1042 = vadd.f32 %v1040, %v1041
    %v1043 = vrot.slane %v1042, 4
    %v1044 = vadd.f32 %v1042, %v1043
    %v1045 = vrot.slane %v1044, 2
    %v1046 = vadd.f32 %v1044, %v1045
    %v1047 = vrot.slane %v1046, 1
    %v1048 = vadd.f32 %v1046, %v1047
    %v1049 = vmul.f32 %v1035, %v1035
    %v1050 = vmul.f32 %v1038, %v1038
    %v1051 = vsel %vm427, %v1049, 0.0
    %v1052 = vsel %vm427, %v1050, 0.0
    %v1053 = vadd.f32 %v1051, %v1052
    %v1054 = vrot.slane %v1053, 4
    %v1055 = vadd.f32 %v1053, %v1054
    %v1056 = vrot.slane %v1055, 2
    %v1057 = vadd.f32 %v1055, %v1056
    %v1058 = vrot.slane %v1057, 1
    %v1059 = vadd.f32 %v1057, %v1058
    %v1060 = vmul.f32 %v1048, 0.0625
    %v1061 = vmul.f32 %v1059, 0.0625
    %v1062 = vmul.f32 %v1060, %v1060
    %v1063 = vsub.f32 %v1061, %v1062
    %v1064 = vsub.f32 %v1035, %v1060
    %v1065 = vsub.f32 %v1038, %v1060
    %v1066 = vadd.f32 %v1063, 1e-05
    %v1067 = vrsqrt.pop %v1066
    %v1068 = vmul.f32 %v1067, %v1066
    %v1069 = vmul.f32 %v1068, %v1067
    %v1070 = vmul.f32 0.5, %v1069
    %v1071 = vsub.f32 1.5, %v1070
    %v1072 = vmul.f32 %v1067, %v1071
    %vm1073 = vweird.f32 %v1066
    %vm1074 = vweird.f32 %v1067
    %vm1075 = vmor %vm1073, %vm1074
    %v1076 = vsel %vm1075, %v1067, %v1072
    %v1077 = vmul.f32 %v1064, %v1076
    %v1078 = vmul.f32 %v1065, %v1076
    %v1079 = vmax.f32 %v1077, 0.0
    %v1080 = vmax.f32 %v1078, 0.0
    %v1081 = vld [vmem:[#allocation20] sm:$0xff]
    %v1082 = vld [vmem:[#allocation20 + $0x8] sm:$0xff]
    %v1083 = vld [vmem:[#allocation20 + $0x10] sm:$0xff]
    %v1084 = vld [vmem:[#allocation20 + $0x18] sm:$0xff]
    %v1085 = vld [vmem:[#allocation20 + $0x20] sm:$0xff]
    %v1086 = vld [vmem:[#allocation20 + $0x28] sm:$0xff]
    %v1087 = vld [vmem:[#allocation20 + $0x30] sm:$0xff]
    %v1088 = vld [vmem:[#allocation20 + $0x38] sm:$0xff]
    %v1089 = vld [vmem:[%s55] sm:$0x1]
    %v1090 = vld [vmem:[#allocation22] sm:$0xff]
    %v1091 = vld [vmem:[#allocation22 + $0x8] sm:$0xff]
    %v1092 = vld [vmem:[#allocation22 + $0x10] sm:$0xff]
    %v1093 = vld [vmem:[#allocation22 + $0x18] sm:$0xff]
    %v1094 = vld [vmem:[#allocation22 + $0x20] sm:$0xff]
    %v1095 = vld [vmem:[#allocation22 + $0x28] sm:$0xff]
    %v1096 = vld [vmem:[#allocation22 + $0x30] sm:$0xff]
    %v1097 = vld [vmem:[#allocation22 + $0x38] sm:$0xff]
    %v1098 = vld [vmem:[%s59] sm:$0x1]
    %v1099 = vld [vmem:[#allocation23] sm:$0xff]
    %v1100 = vld [vmem:[#allocation23 + $0x8] sm:$0xff]
    %v1101 = vld [vmem:[#allocation23 + $0x10] sm:$0xff]
    %v1102 = vld [vmem:[#allocation23 + $0x18] sm:$0xff]
    %v1103 = vld [vmem:[#allocation23 + $0x20] sm:$0xff]
    %v1104 = vld [vmem:[#allocation23 + $0x28] sm:$0xff]
    %v1105 = vld [vmem:[#allocation23 + $0x30] sm:$0xff]
    %v1106 = vld [vmem:[#allocation23 + $0x38] sm:$0xff]
    %v1107 = vld [vmem:[%s63] sm:$0x1]
    %v1108 = vpack.c.bf16 %v1080, %v1079
    %1109 = vmatpush.bf16.msra.mxu0 0
    %1110 = vmatpush.bf16.msra.mxu0 0
    %1111 = vmatpush.bf16.msra.mxu0 0
    %1112 = vmatpush.bf16.msra.mxu0 0
    %1113 = vmatpush.bf16.msra.mxu0 0
    %1114 = vmatpush.bf16.msra.mxu0 0
    %1115 = vmatpush.bf16.msra.mxu0 0
    %1116 = vmatpush.bf16.msra.mxu0 %v1108
    %1117 = vmatmul.bf16.gmra.mxu0 %v386
    %v1118 = vpop.f32.mrf.mxu0
    %v1119 = vadd.f32 %v1079, %v1118
    %v1120 = vpop.f32.mrf.mxu0
    %v1121 = vadd.f32 %v1080, %v1120
    %1122 = vdwg.mxu0
    %v1124 = vperm.slane %v1089, 0
    %v1127 = vsel %vm427, %v1119, 0
    %v1130 = vsel %vm427, %v1121, 0
    %1132 = vmatpush.msra.mxu0 0.0
    %1133 = vmatpush.msra.mxu0 0.0
    %1134 = vmatpush.msra.mxu0 0.0
    %1135 = vmatpush.msra.mxu0 0.0
    %1136 = vmatpush.msra.mxu0 0.0
    %1137 = vmatpush.msra.mxu0 0.0
    %1138 = vmatpush.msra.mxu0 0.0
    %1139 = vmatpush.msra.mxu0 0.0
    %1140 = vmatpush.msra.mxu0 %v1088
    %1141 = vmatpush.msra.mxu0 %v1087
    %1142 = vmatpush.msra.mxu0 %v1086
    %1143 = vmatpush.msra.mxu0 %v1085
    %1144 = vmatpush.msra.mxu0 %v1084
    %1145 = vmatpush.msra.mxu0 %v1083
    %1146 = vmatpush.msra.mxu0 %v1082
    %1147 = vmatpush.msra.mxu0 %v1081
    %1148 = vmatmul.f32.gmra.mxu0 %v1127
    %v1149 = vpop.f32.mrf.mxu0
    %v1150 = vadd.f32 %v1124, %v1149
    %1151 = vmatmul.f32.gmra.mxu0 %v1130
    %v1152 = vpop.f32.mrf.mxu0
    %v1153 = vadd.f32 %v1124, %v1152
    %1154 = vdwg.mxu0
    %v1155 = vmax.f32 %v1150, 0.0
    %v1156 = vmax.f32 %v1153, 0.0
    %v1158 = vperm.slane %v1098, 0
    %v1161 = vsel %vm427, %v1155, 0
    %v1164 = vsel %vm427, %v1156, 0
    %1166 = vmatpush.msra.mxu0 0.0
    %1167 = vmatpush.msra.mxu0 0.0
    %1168 = vmatpush.msra.mxu0 0.0
    %1169 = vmatpush.msra.mxu0 0.0
    %1170 = vmatpush.msra.mxu0 0.0
    %1171 = vmatpush.msra.mxu0 0.0
    %1172 = vmatpush.msra.mxu0 0.0
    %1173 = vmatpush.msra.mxu0 0.0
    %1174 = vmatpush.msra.mxu0 %v1097
    %1175 = vmatpush.msra.mxu0 %v1096
    %1176 = vmatpush.msra.mxu0 %v1095
    %1177 = vmatpush.msra.mxu0 %v1094
    %1178 = vmatpush.msra.mxu0 %v1093
    %1179 = vmatpush.msra.mxu0 %v1092
    %1180 = vmatpush.msra.mxu0 %v1091
    %1181 = vmatpush.msra.mxu0 %v1090
    %1182 = vmatmul.f32.gmra.mxu0 %v1161
    %v1183 = vpop.f32.mrf.mxu0
    %v1184 = vadd.f32 %v1158, %v1183
    %1185 = vmatmul.f32.gmra.mxu0 %v1164
    %v1186 = vpop.f32.mrf.mxu0
    %v1187 = vadd.f32 %v1158, %v1186
    %1188 = vdwg.mxu0
    %v1189 = vmax.f32 %v1184, 0.0
    %v1190 = vmax.f32 %v1187, 0.0
    %v1192 = vperm.slane %v1107, 0
    %v1195 = vsel %vm427, %v1189, 0
    %v1198 = vsel %vm427, %v1190, 0
    %1200 = vmatpush.msra.mxu0 0.0
    %1201 = vmatpush.msra.mxu0 0.0
    %1202 = vmatpush.msra.mxu0 0.0
    %1203 = vmatpush.msra.mxu0 0.0
    %1204 = vmatpush.msra.mxu0 0.0
    %1205 = vmatpush.msra.mxu0 0.0
    %1206 = vmatpush.msra.mxu0 0.0
    %1207 = vmatpush.msra.mxu0 0.0
    %1208 = vmatpush.msra.mxu0 %v1106
    %1209 = vmatpush.msra.mxu0 %v1105
    %1210 = vmatpush.msra.mxu0 %v1104
    %1211 = vmatpush.msra.mxu0 %v1103
    %1212 = vmatpush.msra.mxu0 %v1102
    %1213 = vmatpush.msra.mxu0 %v1101
    %1214 = vmatpush.msra.mxu0 %v1100
    %1215 = vmatpush.msra.mxu0 %v1099
    %1216 = vmatmul.f32.gmra.mxu0 %v1195
    %v1217 = vpop.f32.mrf.mxu0
    %v1218 = vadd.f32 %v1192, %v1217
    %1219 = vmatmul.f32.gmra.mxu0 %v1198
    %v1220 = vpop.f32.mrf.mxu0
    %v1221 = vadd.f32 %v1192, %v1220
    %1222 = vdwg.mxu0
    %v1223 = vxor.u32 %v1218, 2147483648
    %v1224 = vxor.u32 %v1221, 2147483648
    %v1225 = vmul.f32 %v1223, 1.442695
    %v1226 = vpow.pop %v1225
    %v1227 = vmul.f32 %v1224, 1.442695
    %v1228 = vpow.pop %v1227
    %v1229 = vadd.f32 %v1226, 1.0
    %v1230 = vadd.f32 %v1228, 1.0
    %v1231 = vrcp.pop %v1229
    %v1232 = vmul.f32 %v1229, %v1231
    %v1233 = vsub.f32 1.0, %v1232
    %v1234 = vmul.f32 %v1231, %v1233
    %v1235 = vadd.f32 %v1231, %v1234
    %vm1236 = vweird.f32 %v1229
    %vm1237 = vweird.f32 %v1231
    %vm1238 = vmor %vm1236, %vm1237
    %v1239 = vsel %vm1238, %v1231, %v1235
    %v1240 = vand.u32 2147483647, %v1229
    %vm1241 = vcmp.eq.f32.partialorder %v1240, 8.507059e+37
    %v1242 = vand.u32 %v1229, 2147483648
    %v1243 = vor.u32 1.1754944e-38, %v1242
    %v1244 = vsel %vm1241, %v1243, %v1239
    %v1245 = vmul.f32 1.0, %v1244
    %v1246 = vrcp.pop %v1230
    %v1247 = vmul.f32 %v1230, %v1246
    %v1248 = vsub.f32 1.0, %v1247
    %v1249 = vmul.f32 %v1246, %v1248
    %v1250 = vadd.f32 %v1246, %v1249
    %vm1251 = vweird.f32 %v1230
    %vm1252 = vweird.f32 %v1246
    %vm1253 = vmor %vm1251, %vm1252
    %v1254 = vsel %vm1253, %v1246, %v1250
    %v1255 = vand.u32 2147483647, %v1230
    %vm1256 = vcmp.eq.f32.partialorder %v1255, 8.507059e+37
    %v1257 = vand.u32 %v1230, 2147483648
    %v1258 = vor.u32 1.1754944e-38, %v1257
    %v1259 = vsel %vm1256, %v1258, %v1254
    %v1260 = vmul.f32 1.0, %v1259
    %1261 = vst [vmem:[#allocation25] sm:$0xff] %v1245
    %1262 = vst [vmem:[#allocation25 + $0x8] sm:$0xff] %v1260
    // Predicated region
    $region186: #{tpu_custom_call.1} parent=1 // pred_check
      _
    $region187: #{tpu_custom_call.1} parent=1 // pred_check_branch
      %1264 = sbr.rel (0) target = $region189
    $region188: #{tpu_custom_call.1} parent=1 // pred_region
      %1266 = vsyncadd [#allocation4], 0
      %s1267 = sshll.u32 [#allocation25], 4
      %s1268 = int_to_ptr.vmem [resolvable:$true] %s1267
      %s1269 = sshll.u32 %s65, 4
      %s1270 = int_to_ptr.hbm [resolvable:$true] %s1269
      %1275 = dma.vmem_to_hbm [thread:$0]  %s1268, 256, %s1270, [#allocation4], 128, 128, 8
    $region189: #{tpu_custom_call.1} parent=1 // pred_fallthru
      _
    // Predicated region
    $region190: #{tpu_custom_call.1} parent=1 // pred_check
      _
    $region191: #{tpu_custom_call.1} parent=1 // pred_check_branch
      %1277 = sbr.rel (0) target = $region193
    $region192: #{tpu_custom_call.1} parent=1 // pred_region
      %1279 = dma.done [#allocation4], 256
    $region193: #{tpu_custom_call.1} parent=1 // pred_fallthru
      _
    %1280 = vsyncpa [#allocation3], 1
    %1281 = vsyncpa [#allocation6], 1
    %1282 = vsyncpa [#allocation9], 1
    %1283 = vsyncpa [#allocation12], 1
    %1284 = vsyncpa [#allocation15], 1
    %1285 = vsyncpa [#allocation18], 1
    %1286 = vsyncpa [#allocation21], 1
    %1287 = vsyncpa [#allocation24], 1
    %1288 = vsyncpa [#allocation4], 1

</llo_original>
